<compile_context>
chip_gen: v6e
topology: v6e:2x2x1
jax: 0.10.0
libtpu: 0.0.40
codegen_flags: <defaults>
</compile_context>

<pallas_src>
import functools

import jax
import jax.numpy as jnp
from jax.experimental import pallas as pl
from jax.experimental.pallas import tpu as pltpu


def _round_up(x, m):
    return ((x + m - 1) // m) * m


# ---------------------------------------------------------------------------
# Kernel 1: tiled MLP (encoder + projection-head linears) + per-tile BN stats.
# ---------------------------------------------------------------------------
def _mlp_stats_kernel(x_ref,
                      w1_ref, b1_ref, w2_ref, b2_ref, w3_ref, b3_ref,
                      wp1_ref, bp1_ref, wp2_ref, bp2_ref,
                      p_ref, pstats_ref, *, tm, n_real):
    f32 = jnp.float32
    i = pl.program_id(0)
    cd = w1_ref.dtype  # bf16 matmul inputs, f32 MXU accumulation.

    x = x_ref[...]
    h = jnp.dot(x.astype(cd), w1_ref[...], preferred_element_type=f32) + b1_ref[...]
    h = jnp.maximum(h, 0.0)
    h = jnp.dot(h.astype(cd), w2_ref[...], preferred_element_type=f32) + b2_ref[...]
    h = jnp.maximum(h, 0.0)
    z = jnp.dot(h.astype(cd), w3_ref[...], preferred_element_type=f32) + b3_ref[...]

    q = jnp.dot(z.astype(cd), wp1_ref[...], preferred_element_type=f32) + bp1_ref[...]
    q = jnp.maximum(q, 0.0)
    p = jnp.dot(q.astype(cd), wp2_ref[...], preferred_element_type=f32) + bp2_ref[...]

    p_ref[...] = p

    # Per-tile partial BatchNorm statistics. Mask padded rows so that the
    # statistics cover exactly the real batch.
    row = i * tm + jax.lax.broadcasted_iota(jnp.int32, p.shape, 0)
    p_m = jnp.where(row < n_real, p, 0.0)
    s = jnp.sum(p_m, axis=0, keepdims=True)                 # (1, D)
    ss = jnp.sum(p_m * p_m, axis=0, keepdims=True)          # (1, D)
    pad = jnp.zeros((6, p.shape[1]), f32)                   # rows 2..7 unused
    pstats_ref[...] = jnp.concatenate([s, ss, pad], axis=0)[None]


# ---------------------------------------------------------------------------
# Kernel 2: BatchNorm1d (train-mode, biased variance) + L2 normalize epilogue.
# ---------------------------------------------------------------------------
def _bn_l2norm_kernel(p_ref, pstats_ref, gamma_ref, beta_ref, out_ref, *, n_real):
    inv_n = 1.0 / float(n_real)
    totals = jnp.sum(pstats_ref[...], axis=0)               # (8, D), rows 0/1 used
    mean = totals[0:1, :] * inv_n
    var = totals[1:2, :] * inv_n - mean * mean               # biased variance
    scale = jax.lax.rsqrt(var + 1e-5) * gamma_ref[...]
    shift = beta_ref[...] - mean * scale
    q = p_ref[...] * scale + shift
    sq = jnp.sum(q * q, axis=1, keepdims=True)
    # F.normalize(dim=1, eps=1e-12): rsqrt(max(||q||^2, eps^2)) == 1/max(||q||, eps)
    out_ref[...] = q * jax.lax.rsqrt(jnp.maximum(sq, 1e-24))


# ---------------------------------------------------------------------------
# Wrapper
# ---------------------------------------------------------------------------
def encoder_projection_head(x, params, *, block_m=256):
    """x: [batch, input_dim] float32. params: weights stored [in, out] (bf16),
    biases / BN params stored [1, dim] (f32)."""
    n_real, input_dim = x.shape
    out_dim = params["wp2"].shape[1]  # 128

    # Batch tile: full MXU rows when possible (256 v6e/v7x, 128 v5e), >=8, x8.
    tm = min(block_m, _round_up(n_real, 8))
    batch_pad = _round_up(n_real, tm)
    num_tiles = batch_pad // tm
    if batch_pad != n_real:
        x = jnp.pad(x, ((0, batch_pad - n_real), (0, 0)))

    weights = (params["w1"], params["b1"], params["w2"], params["b2"],
               params["w3"], params["b3"], params["wp1"], params["bp1"],
               params["wp2"], params["bp2"])

    const2 = lambda i: (0, 0)
    w_specs = [pl.BlockSpec(w.shape, const2) for w in weights]  # resident in VMEM

    d_half = params["w1"].shape[1]
    hid1 = params["w2"].shape[1]
    enc_out = params["w3"].shape[1]
    proj_hid = params["wp1"].shape[1]

    mm_flops = 2 * batch_pad * (input_dim * d_half + d_half * hid1 +
                                hid1 * enc_out + enc_out * proj_hid +
                                proj_hid * out_dim)
    w_bytes = sum(int(w.size) * w.dtype.itemsize for w in weights)
    cost1 = pl.CostEstimate(
        flops=mm_flops,
        transcendentals=0,
        bytes_accessed=int(x.size) * 4 + w_bytes
        + batch_pad * out_dim * 4 + num_tiles * 8 * out_dim * 4)

    p, pstats = pl.pallas_call(
        functools.partial(_mlp_stats_kernel, tm=tm, n_real=n_real),
        grid=(num_tiles,),
        in_specs=[pl.BlockSpec((tm, input_dim), lambda i: (i, 0))] + w_specs,
        out_specs=(
            pl.BlockSpec((tm, out_dim), lambda i: (i, 0)),
            pl.BlockSpec((1, 8, out_dim), lambda i: (i, 0, 0)),  # per-tile partials
        ),
        out_shape=(
            jax.ShapeDtypeStruct((batch_pad, out_dim), jnp.float32),
            jax.ShapeDtypeStruct((num_tiles, 8, out_dim), jnp.float32),
        ),
        compiler_params=pltpu.CompilerParams(
            dimension_semantics=("parallel",),    # independent tiles -> megacore on v7x
            vmem_limit_bytes=32 << 20),           # v7x-safe (64 MiB physical VMEM)
        cost_estimate=cost1,
    )(x, *weights)

    cost2 = pl.CostEstimate(
        flops=8 * batch_pad * out_dim + num_tiles * 8 * out_dim,
        transcendentals=batch_pad + out_dim,
        bytes_accessed=2 * batch_pad * out_dim * 4 + num_tiles * 8 * out_dim * 4)

    out = pl.pallas_call(
        functools.partial(_bn_l2norm_kernel, n_real=n_real),
        grid=(num_tiles,),
        in_specs=[
            pl.BlockSpec((tm, out_dim), lambda i: (i, 0)),
            pl.BlockSpec((num_tiles, 8, out_dim), lambda i: (0, 0, 0)),
            pl.BlockSpec((1, out_dim), lambda i: (0, 0)),
            pl.BlockSpec((1, out_dim), lambda i: (0, 0)),
        ],
        out_specs=pl.BlockSpec((tm, out_dim), lambda i: (i, 0)),
        out_shape=jax.ShapeDtypeStruct((batch_pad, out_dim), jnp.float32),
        compiler_params=pltpu.CompilerParams(
            dimension_semantics=("parallel",),
            vmem_limit_bytes=32 << 20),
        cost_estimate=cost2,
    )(p, pstats, params["gamma"], params["beta"])

    return out[:n_real]


def init_params(key, input_dim, hidden_dim1, latent_dim, output_dim):
    """Deterministic synthetic init. Linear weights stored [in, out] in bf16
    (MXU-native); biases / BN params in f32."""
    dims = [
        ("w1", "b1", input_dim, input_dim // 2),
        ("w2", "b2", input_dim // 2, hidden_dim1),
        ("w3", "b3", hidden_dim1, output_dim),
        ("wp1", "bp1", latent_dim, 256),
        ("wp2", "bp2", 256, 128),
    ]
    params = {}
    keys = jax.random.split(key, len(dims) * 2)
    for i, (wname, bname, d_in, d_out) in enumerate(dims):
        params[wname] = (0.02 * jax.random.normal(keys[2 * i], (d_in, d_out))
                         ).astype(jnp.bfloat16)
        params[bname] = (0.01 * jax.random.normal(keys[2 * i + 1], (1, d_out))
                         ).astype(jnp.float32)
    # BatchNorm1d(128) affine params (PyTorch default: gamma=1, beta=0).
    params["gamma"] = jnp.ones((1, 128), jnp.float32)
    params["beta"] = jnp.zeros((1, 128), jnp.float32)
    return params


def reference(x, p):
    """Pure-JAX reference using the same bf16-input / f32-accumulate matmuls."""
    f32, bf16 = jnp.float32, jnp.bfloat16

    def lin(a, w, b):
        return jnp.dot(a.astype(bf16), w, preferred_element_type=f32) + b

    h = jnp.maximum(lin(x, p["w1"], p["b1"]), 0.0)
    h = jnp.maximum(lin(h, p["w2"], p["b2"]), 0.0)
    z = lin(h, p["w3"], p["b3"])
    q = jnp.maximum(lin(z, p["wp1"], p["bp1"]), 0.0)
    q = lin(q, p["wp2"], p["bp2"])
    mean = jnp.mean(q, axis=0, keepdims=True)
    var = jnp.mean((q - mean) ** 2, axis=0, keepdims=True)
    q = (q - mean) * jax.lax.rsqrt(var + 1e-5) * p["gamma"] + p["beta"]
    norm = jnp.sqrt(jnp.sum(q * q, axis=1, keepdims=True))
    return q / jnp.maximum(norm, 1e-12)


if __name__ == "__main__":
    # Small shapes consistent with the module (latent_dim == output_dim so the
    # encoder output feeds the projection head). batch=200 is not a multiple of
    # the 128-row tile, exercising the padding / stats-masking path.
    batch = 200
    input_dim = 256
    hidden_dim1 = 128
    output_dim = latent_dim = 128

    key = jax.random.PRNGKey(0)
    k_x, k_p = jax.random.split(key)
    x = jax.random.normal(k_x, (batch, input_dim), dtype=jnp.float32)
    params = init_params(k_p, input_dim, hidden_dim1, latent_dim, output_dim)

    out = jax.block_until_ready(encoder_projection_head(x, params, block_m=128))

    ref = reference(x, params)
    assert out.shape == (batch, 128)
    assert jnp.allclose(out, ref, atol=2e-3, rtol=2e-3), \
        f"mismatch vs JAX reference, max abs err {float(jnp.max(jnp.abs(out - ref)))}"

    print("KERNEL_OK")
</pallas_src>

<mosaic_0001>
module attributes {stable_mosaic.version = 11 : i64} {
  func.func @_mlp_stats_kernel(%arg0: i32, %arg1: memref<128x256xf32, #tpu.memory_space<vmem>>, %arg2: memref<256x128xbf16, #tpu.memory_space<vmem>>, %arg3: memref<1x128xf32, #tpu.memory_space<vmem>>, %arg4: memref<128x128xbf16, #tpu.memory_space<vmem>>, %arg5: memref<1x128xf32, #tpu.memory_space<vmem>>, %arg6: memref<128x128xbf16, #tpu.memory_space<vmem>>, %arg7: memref<1x128xf32, #tpu.memory_space<vmem>>, %arg8: memref<128x256xbf16, #tpu.memory_space<vmem>>, %arg9: memref<1x256xf32, #tpu.memory_space<vmem>>, %arg10: memref<256x128xbf16, #tpu.memory_space<vmem>>, %arg11: memref<1x128xf32, #tpu.memory_space<vmem>>, %arg12: memref<128x128xf32, #tpu.memory_space<vmem>>, %arg13: memref<1x8x128xf32, #tpu.memory_space<vmem>>) attributes {dimension_semantics = [#tpu.dimension_semantics<parallel>], iteration_bounds = array<i64: 2>, scalar_prefetch = 0 : i64, scratch_operands = 0 : i64, tpu.core_type = #tpu.core_type<tc>, window_params = [{transform_indices = @transform_0, window_bounds = array<i64: 128, 256>}, {pipeline_mode = #tpu.pipeline_mode<synchronous>, transform_indices = @transform_1, window_bounds = array<i64: 256, 128>}, {pipeline_mode = #tpu.pipeline_mode<synchronous>, transform_indices = @transform_2, window_bounds = array<i64: 1, 128>}, {pipeline_mode = #tpu.pipeline_mode<synchronous>, transform_indices = @transform_3, window_bounds = array<i64: 128, 128>}, {pipeline_mode = #tpu.pipeline_mode<synchronous>, transform_indices = @transform_4, window_bounds = array<i64: 1, 128>}, {pipeline_mode = #tpu.pipeline_mode<synchronous>, transform_indices = @transform_5, window_bounds = array<i64: 128, 128>}, {pipeline_mode = #tpu.pipeline_mode<synchronous>, transform_indices = @transform_6, window_bounds = array<i64: 1, 128>}, {pipeline_mode = #tpu.pipeline_mode<synchronous>, transform_indices = @transform_7, window_bounds = array<i64: 128, 256>}, {pipeline_mode = #tpu.pipeline_mode<synchronous>, transform_indices = @transform_8, window_bounds = array<i64: 1, 256>}, {pipeline_mode = #tpu.pipeline_mode<synchronous>, transform_indices = @transform_9, window_bounds = array<i64: 256, 128>}, {pipeline_mode = #tpu.pipeline_mode<synchronous>, transform_indices = @transform_10, window_bounds = array<i64: 1, 128>}, {transform_indices = @transform_11, window_bounds = array<i64: 128, 128>}, {transform_indices = @transform_12, window_bounds = array<i64: 1, 8, 128>}]} {
    %c0 = arith.constant 0 : index
    %c0_0 = arith.constant 0 : index
    %0 = vector.load %arg1[%c0, %c0_0] : memref<128x256xf32, #tpu.memory_space<vmem>>, vector<128x256xf32>
    %1 = arith.truncf %0 : vector<128x256xf32> to vector<128x256xbf16>
    %c0_1 = arith.constant 0 : index
    %c0_2 = arith.constant 0 : index
    %2 = vector.load %arg2[%c0_1, %c0_2] : memref<256x128xbf16, #tpu.memory_space<vmem>>, vector<256x128xbf16>
    %cst = arith.constant dense<0.000000e+00> : vector<128x128xf32>
    %3 = tpu.matmul %1, %2, %cst {dimension_numbers = #tpu.dot_dimension_numbers<[1], [0], [0], [1], [0, 0, 1, 1], [], []>} : vector<128x256xbf16>, vector<256x128xbf16>, vector<128x128xf32> -> vector<128x128xf32>
    %c0_3 = arith.constant 0 : index
    %c0_4 = arith.constant 0 : index
    %4 = vector.load %arg3[%c0_3, %c0_4] : memref<1x128xf32, #tpu.memory_space<vmem>>, vector<1x128xf32>
    %5 = vector.broadcast %4 : vector<1x128xf32> to vector<128x128xf32>
    %6 = arith.addf %3, %5 : vector<128x128xf32>
    %cst_5 = arith.constant 0.000000e+00 : f32
    %7 = vector.broadcast %cst_5 : f32 to vector<128x128xf32>
    %8 = arith.maximumf %6, %7 : vector<128x128xf32>
    %9 = arith.truncf %8 : vector<128x128xf32> to vector<128x128xbf16>
    %c0_6 = arith.constant 0 : index
    %c0_7 = arith.constant 0 : index
    %10 = vector.load %arg4[%c0_6, %c0_7] : memref<128x128xbf16, #tpu.memory_space<vmem>>, vector<128x128xbf16>
    %cst_8 = arith.constant dense<0.000000e+00> : vector<128x128xf32>
    %11 = tpu.matmul %9, %10, %cst_8 {dimension_numbers = #tpu.dot_dimension_numbers<[1], [0], [0], [1], [0, 0, 1, 1], [], []>} : vector<128x128xbf16>, vector<128x128xbf16>, vector<128x128xf32> -> vector<128x128xf32>
    %c0_9 = arith.constant 0 : index
    %c0_10 = arith.constant 0 : index
    %12 = vector.load %arg5[%c0_9, %c0_10] : memref<1x128xf32, #tpu.memory_space<vmem>>, vector<1x128xf32>
    %13 = vector.broadcast %12 : vector<1x128xf32> to vector<128x128xf32>
    %14 = arith.addf %11, %13 : vector<128x128xf32>
    %cst_11 = arith.constant 0.000000e+00 : f32
    %15 = vector.broadcast %cst_11 : f32 to vector<128x128xf32>
    %16 = arith.maximumf %14, %15 : vector<128x128xf32>
    %17 = arith.truncf %16 : vector<128x128xf32> to vector<128x128xbf16>
    %c0_12 = arith.constant 0 : index
    %c0_13 = arith.constant 0 : index
    %18 = vector.load %arg6[%c0_12, %c0_13] : memref<128x128xbf16, #tpu.memory_space<vmem>>, vector<128x128xbf16>
    %cst_14 = arith.constant dense<0.000000e+00> : vector<128x128xf32>
    %19 = tpu.matmul %17, %18, %cst_14 {dimension_numbers = #tpu.dot_dimension_numbers<[1], [0], [0], [1], [0, 0, 1, 1], [], []>} : vector<128x128xbf16>, vector<128x128xbf16>, vector<128x128xf32> -> vector<128x128xf32>
    %c0_15 = arith.constant 0 : index
    %c0_16 = arith.constant 0 : index
    %20 = vector.load %arg7[%c0_15, %c0_16] : memref<1x128xf32, #tpu.memory_space<vmem>>, vector<1x128xf32>
    %21 = vector.broadcast %20 : vector<1x128xf32> to vector<128x128xf32>
    %22 = arith.addf %19, %21 : vector<128x128xf32>
    %23 = arith.truncf %22 : vector<128x128xf32> to vector<128x128xbf16>
    %c0_17 = arith.constant 0 : index
    %c0_18 = arith.constant 0 : index
    %24 = vector.load %arg8[%c0_17, %c0_18] : memref<128x256xbf16, #tpu.memory_space<vmem>>, vector<128x256xbf16>
    %cst_19 = arith.constant dense<0.000000e+00> : vector<128x256xf32>
    %25 = tpu.matmul %23, %24, %cst_19 {dimension_numbers = #tpu.dot_dimension_numbers<[1], [0], [0], [1], [0, 0, 1, 1], [], []>} : vector<128x128xbf16>, vector<128x256xbf16>, vector<128x256xf32> -> vector<128x256xf32>
    %c0_20 = arith.constant 0 : index
    %c0_21 = arith.constant 0 : index
    %26 = vector.load %arg9[%c0_20, %c0_21] : memref<1x256xf32, #tpu.memory_space<vmem>>, vector<1x256xf32>
    %27 = vector.broadcast %26 : vector<1x256xf32> to vector<128x256xf32>
    %28 = arith.addf %25, %27 : vector<128x256xf32>
    %cst_22 = arith.constant 0.000000e+00 : f32
    %29 = vector.broadcast %cst_22 : f32 to vector<128x256xf32>
    %30 = arith.maximumf %28, %29 : vector<128x256xf32>
    %31 = arith.truncf %30 : vector<128x256xf32> to vector<128x256xbf16>
    %c0_23 = arith.constant 0 : index
    %c0_24 = arith.constant 0 : index
    %32 = vector.load %arg10[%c0_23, %c0_24] : memref<256x128xbf16, #tpu.memory_space<vmem>>, vector<256x128xbf16>
    %cst_25 = arith.constant dense<0.000000e+00> : vector<128x128xf32>
    %33 = tpu.matmul %31, %32, %cst_25 {dimension_numbers = #tpu.dot_dimension_numbers<[1], [0], [0], [1], [0, 0, 1, 1], [], []>} : vector<128x256xbf16>, vector<256x128xbf16>, vector<128x128xf32> -> vector<128x128xf32>
    %c0_26 = arith.constant 0 : index
    %c0_27 = arith.constant 0 : index
    %34 = vector.load %arg11[%c0_26, %c0_27] : memref<1x128xf32, #tpu.memory_space<vmem>>, vector<1x128xf32>
    %35 = vector.broadcast %34 : vector<1x128xf32> to vector<128x128xf32>
    %36 = arith.addf %33, %35 : vector<128x128xf32>
    %c0_28 = arith.constant 0 : index
    %c0_29 = arith.constant 0 : index
    %37 = vector.load %arg12[%c0_28, %c0_29] : memref<128x128xf32, #tpu.memory_space<vmem>>, vector<128x128xf32>
    tpu.vector_store %arg12[%c0_28, %c0_29], %36 {strides = array<i32>} : memref<128x128xf32, #tpu.memory_space<vmem>>, vector<128x128xf32>,
    %c128_i32 = arith.constant 128 : i32
    %38 = arith.muli %arg0, %c128_i32 : i32
    %39 = tpu.iota {dimensions = array<i32: 0>} : vector<128x128xi32>
    %40 = vector.broadcast %38 : i32 to vector<128x128xi32>
    %41 = arith.addi %40, %39 : vector<128x128xi32>
    %c200_i32 = arith.constant 200 : i32
    %42 = vector.broadcast %c200_i32 : i32 to vector<128x128xi32>
    %43 = arith.cmpi slt, %41, %42 : vector<128x128xi32>
    %cst_30 = arith.constant 0.000000e+00 : f32
    %44 = vector.broadcast %cst_30 : f32 to vector<128x128xf32>
    %45 = arith.select %43, %36, %44 : vector<128x128xi1>, vector<128x128xf32>
    %cst_31 = arith.constant dense<0.000000e+00> : vector<128xf32>
    %46 = vector.multi_reduction <add>, %45, %cst_31 [0] : vector<128x128xf32> to vector<128xf32>
    %47 = vector.shape_cast %46 : vector<128xf32> to vector<1x128xf32>
    %48 = arith.mulf %45, %45 : vector<128x128xf32>
    %cst_32 = arith.constant dense<0.000000e+00> : vector<128xf32>
    %49 = vector.multi_reduction <add>, %48, %cst_32 [0] : vector<128x128xf32> to vector<128xf32>
    %50 = vector.shape_cast %49 : vector<128xf32> to vector<1x128xf32>
    %cst_33 = arith.constant 0.000000e+00 : f32
    %51 = vector.broadcast %cst_33 : f32 to vector<6x128xf32>
    %52 = tpu.concatenate %47, %50, %51 in 0 : vector<1x128xf32>, vector<1x128xf32>, vector<6x128xf32> -> vector<8x128xf32>
    %53 = vector.shape_cast %52 : vector<8x128xf32> to vector<1x8x128xf32>
    %c0_34 = arith.constant 0 : index
    %c0_35 = arith.constant 0 : index
    %c0_36 = arith.constant 0 : index
    %54 = vector.load %arg13[%c0_34, %c0_35, %c0_36] : memref<1x8x128xf32, #tpu.memory_space<vmem>>, vector<1x8x128xf32>
    tpu.vector_store %arg13[%c0_34, %c0_35, %c0_36], %53 {strides = array<i32>} : memref<1x8x128xf32, #tpu.memory_space<vmem>>, vector<1x8x128xf32>,
    return
  }
  func.func @transform_0(%arg0: i32) -> (i32, i32) {
    %c0_i32 = arith.constant 0 : i32
    %c0_i32_0 = arith.constant 0 : i32
    return %arg0, %c0_i32 : i32, i32
  }
  func.func @transform_1(%arg0: i32) -> (i32, i32) {
    %c0_i32 = arith.constant 0 : i32
    %c0_i32_0 = arith.constant 0 : i32
    %c0_i32_1 = arith.constant 0 : i32
    return %c0_i32, %c0_i32_0 : i32, i32
  }
  func.func @transform_2(%arg0: i32) -> (i32, i32) {
    %c0_i32 = arith.constant 0 : i32
    %c0_i32_0 = arith.constant 0 : i32
    %c0_i32_1 = arith.constant 0 : i32
    return %c0_i32, %c0_i32_0 : i32, i32
  }
  func.func @transform_3(%arg0: i32) -> (i32, i32) {
    %c0_i32 = arith.constant 0 : i32
    %c0_i32_0 = arith.constant 0 : i32
    %c0_i32_1 = arith.constant 0 : i32
    return %c0_i32, %c0_i32_0 : i32, i32
  }
  func.func @transform_4(%arg0: i32) -> (i32, i32) {
    %c0_i32 = arith.constant 0 : i32
    %c0_i32_0 = arith.constant 0 : i32
    %c0_i32_1 = arith.constant 0 : i32
    return %c0_i32, %c0_i32_0 : i32, i32
  }
  func.func @transform_5(%arg0: i32) -> (i32, i32) {
    %c0_i32 = arith.constant 0 : i32
    %c0_i32_0 = arith.constant 0 : i32
    %c0_i32_1 = arith.constant 0 : i32
    return %c0_i32, %c0_i32_0 : i32, i32
  }
  func.func @transform_6(%arg0: i32) -> (i32, i32) {
    %c0_i32 = arith.constant 0 : i32
    %c0_i32_0 = arith.constant 0 : i32
    %c0_i32_1 = arith.constant 0 : i32
    return %c0_i32, %c0_i32_0 : i32, i32
  }
  func.func @transform_7(%arg0: i32) -> (i32, i32) {
    %c0_i32 = arith.constant 0 : i32
    %c0_i32_0 = arith.constant 0 : i32
    %c0_i32_1 = arith.constant 0 : i32
    return %c0_i32, %c0_i32_0 : i32, i32
  }
  func.func @transform_8(%arg0: i32) -> (i32, i32) {
    %c0_i32 = arith.constant 0 : i32
    %c0_i32_0 = arith.constant 0 : i32
    %c0_i32_1 = arith.constant 0 : i32
    return %c0_i32, %c0_i32_0 : i32, i32
  }
  func.func @transform_9(%arg0: i32) -> (i32, i32) {
    %c0_i32 = arith.constant 0 : i32
    %c0_i32_0 = arith.constant 0 : i32
    %c0_i32_1 = arith.constant 0 : i32
    return %c0_i32, %c0_i32_0 : i32, i32
  }
  func.func @transform_10(%arg0: i32) -> (i32, i32) {
    %c0_i32 = arith.constant 0 : i32
    %c0_i32_0 = arith.constant 0 : i32
    %c0_i32_1 = arith.constant 0 : i32
    return %c0_i32, %c0_i32_0 : i32, i32
  }
  func.func @transform_11(%arg0: i32) -> (i32, i32) {
    %c0_i32 = arith.constant 0 : i32
    %c0_i32_0 = arith.constant 0 : i32
    return %arg0, %c0_i32 : i32, i32
  }
  func.func @transform_12(%arg0: i32) -> (i32, i32, i32) {
    %c0_i32 = arith.constant 0 : i32
    %c0_i32_0 = arith.constant 0 : i32
    %c0_i32_1 = arith.constant 0 : i32
    return %arg0, %c0_i32, %c0_i32_0 : i32, i32, i32
  }
}

</mosaic_0001>

<llo_original>
// kernel: tpu_custom_call.1
$region0: #{tpu_custom_call.1}
  #allocation0 [shape = 'u32[]', space=smem, size = 0x4, offset = 0x4, fixed_abs, tag = 'smem constant byte address 0x4 - core index']
  #allocation1 [shape = 'u32[144,128]{1,0:T(1,128)}', space=vmem, size = 0x12000, scoped, tag = 'internal scratch']
  %s0 = inlined_call_operand.hbm [shape: f32[256,256], index: 0, kind: input, shape index: {}]
  %s1 = inlined_call_operand.hbm [shape: bf16[256,128], index: 1, kind: input, shape index: {}]
  %s2 = inlined_call_operand.vmem [shape: f32[1,128], index: 2, kind: input, shape index: {}]
  %s3 = inlined_call_operand.hbm [shape: bf16[128,128], index: 3, kind: input, shape index: {}]
  %s4 = inlined_call_operand.vmem [shape: f32[1,128], index: 4, kind: input, shape index: {}]
  %s5 = inlined_call_operand.hbm [shape: bf16[128,128], index: 5, kind: input, shape index: {}]
  %s6 = inlined_call_operand.vmem [shape: f32[1,128], index: 6, kind: input, shape index: {}]
  %s7 = inlined_call_operand.hbm [shape: bf16[128,256], index: 7, kind: input, shape index: {}]
  %s8 = inlined_call_operand.vmem [shape: f32[1,256], index: 8, kind: input, shape index: {}]
  %s9 = inlined_call_operand.hbm [shape: bf16[256,128], index: 9, kind: input, shape index: {}]
  %s10 = inlined_call_operand.vmem [shape: f32[1,128], index: 10, kind: input, shape index: {}]
  %s11 = inlined_call_operand.hbm [shape: f32[256,128], index: 11, kind: output, shape index: {0}]
  %s12 = inlined_call_operand.hbm [shape: f32[2,8,128], index: 12, kind: output, shape index: {1}]
  %13 = xla_tuple %s11, %s12
  %s14 = sld [smem:[#allocation0]]
  $region109: #{tpu_custom_call.1} parent=0
    _
  %s16 = ssub.s32 1, %s14
  %s17 = scalar_select 0, %s16, %s14
  $region1: #{tpu_custom_call.1} parent=0
    #allocation2 [shape = 'u8[262144]{0}', space=vmem, size = 0x40000, scoped, tag = 'input window, operand 0']
    #allocation3 [shape = 's32[2]{0}', space=sflag, size = 0x8, scoped, tag = 'scoped memory for tpu_custom_call.1']
    #allocation4 [shape = 's32[2]{0}', space=sflag, size = 0x8, scoped, tag = 'scoped memory for tpu_custom_call.1']
    #allocation5 [shape = 'u8[65536]{0}', space=vmem, size = 0x10000, scoped, tag = 'input window, operand 1, single buffered']
    #allocation6 [shape = 's32[1]{0}', space=sflag, size = 0x4, scoped, tag = 'scoped memory for tpu_custom_call.1']
    #allocation7 [shape = 'u8[32768]{0}', space=vmem, size = 0x8000, scoped, tag = 'input window, operand 3, single buffered']
    #allocation8 [shape = 'u8[32768]{0}', space=vmem, size = 0x8000, scoped, tag = 'input window, operand 5, single buffered']
    #allocation9 [shape = 's32[1]{0}', space=sflag, size = 0x4, scoped, tag = 'scoped memory for tpu_custom_call.1']
    #allocation10 [shape = 'u8[65536]{0}', space=vmem, size = 0x10000, scoped, tag = 'input window, operand 7, single buffered']
    #allocation11 [shape = 'u8[65536]{0}', space=vmem, size = 0x10000, scoped, tag = 'input window, operand 9, single buffered']
    #allocation12 [shape = 's32[1]{0}', space=sflag, size = 0x4, scoped, tag = 'scoped memory for tpu_custom_call.1']
    #allocation13 [shape = 'u8[131072]{0}', space=vmem, size = 0x20000, scoped, tag = 'output window, operand 0']
    #allocation14 [shape = 'u8[8192]{0}', space=vmem, size = 0x2000, scoped, tag = 'output window, operand 1']
    #allocation15 [shape = 's32[2]{0}', space=sflag, size = 0x8, scoped, tag = 'scoped memory for tpu_custom_call.1']
    %18 = vsyncpa [#allocation3], 0
    %s19 = scalar_lea.sflag [#allocation3], 1
    %20 = vsyncpa %s19, 0
    %21 = vsyncpa [#allocation6], 0
    %22 = vsyncpa [#allocation9], 0
    %23 = vsyncpa [#allocation12], 0
    %24 = vsyncpa [#allocation4], 0
    %s25 = scalar_lea.sflag [#allocation4], 1
    %26 = vsyncpa %s25, 0
    %27 = vsyncpa [#allocation15], 0
    %s28 = scalar_lea.sflag [#allocation15], 1
    %29 = vsyncpa %s28, 0
    loop: start=0, step=1, limit=4
    $region2: #{tpu_custom_call.1} parent=1 // loop_pre_header
      _
    $region3: #{tpu_custom_call.1} parent=1 // loop_header
      %s31 = sphi 0, %s35
      %p32 = scmp.ge.s32.totalorder %s31, 4
      %s41 = sphi 0, %s43
      %s44 = sphi 0, %s41
      %s45 = sphi 0, %s44
      %s61 = sphi 0, %s45
      %s65 = sphi 0, %s65
      %s67 = sphi 0, %s65
      %s68 = sphi 0, %s67
      %s82 = sphi 0, %s68
      %s86 = sphi 0, %s86
      %s88 = sphi 0, %s86
      %s89 = sphi 0, %s88
      %s103 = sphi 0, %s89
      %s107 = sphi 0, %s107
      %s109 = sphi 0, %s107
      %s110 = sphi 0, %s109
      %s124 = sphi 0, %s110
      %s128 = sphi 0, %s128
      %s130 = sphi 0, %s128
      %s131 = sphi 0, %s130
      %s145 = sphi 0, %s131
      %s149 = sphi 0, %s149
      %s151 = sphi 0, %s149
      %s152 = sphi 0, %s151
      %s166 = sphi 0, %s152
      %s170 = sphi 0, %s170
      %s172 = sphi 0, %s170
      %s173 = sphi 0, %s172
      %s187 = sphi 0, %s173
      %s191 = sphi 0, %s191
      %s193 = sphi 0, %s191
      %s194 = sphi 0, %s193
      %s208 = sphi 0, %s194
      %s212 = sphi 0, %s212
      %s214 = sphi 0, %s212
      %s215 = sphi 0, %s214
      %s229 = sphi 0, %s215
      %s233 = sphi 0, %s233
      %s235 = sphi 0, %s233
      %s236 = sphi 0, %s235
      %s250 = sphi 0, %s236
      %s254 = sphi 0, %s254
      %s256 = sphi 0, %s254
      %s257 = sphi 0, %s256
      %s271 = sphi 0, %s257
      %s277 = sphi 0, %s279
      %s280 = sphi 0, %s277
      %s281 = sphi 0, %s280
      %s297 = sphi 0, %s281
      %s303 = sphi 0, %s305
      %s306 = sphi 0, %s303
      %s307 = sphi 0, %s306
      %s323 = sphi 0, %s307
    $region4: #{tpu_custom_call.1} parent=1 // loop_header_branch
      %34 = sbr.rel (%p32) target = $region8
    $region5: #{tpu_custom_call.1} parent=1 // loop_body
      %s36 = ssub.s32 %s31, 1
      %s37 = ssub.s32 %s31, 2
      %s38 = sadd.s32 %s31, 1
      %s39 = ssub.s32 %s31, %s38
      %p40 = scmp.eq.s32.totalorder %s39, 0
      %s42 = sadd.s32 %s41, 1
      %s43 = scalar_select %p40, %s41, %s42
      %p46 = pneg %p40
      %p47 = scmp.eq.s32.totalorder %s31, 1
      %p48 = por %p46, %p47
      %p49 = scmp.ne.s32.totalorder %s41, %s44
      %p50 = scmp.eq.s32.totalorder %s31, 0
      %p51 = por %p49, %p50
      %p52 = scmp.ne.s32.totalorder %s41, %s44
      %p53 = scmp.eq.s32.totalorder %s36, 1
      %p54 = por %p52, %p53
      %p55 = scmp.ne.s32.totalorder %s44, %s45
      %p56 = scmp.eq.s32.totalorder %s36, 0
      %p57 = por %p55, %p56
      %p58 = scmp.ne.s32.totalorder %s44, %s45
      %p59 = scmp.eq.s32.totalorder %s37, 1
      %p60 = por %p58, %p59
      %p62 = scmp.ne.s32.totalorder %s45, %s61
      %p63 = scmp.eq.s32.totalorder %s37, 0
      %p64 = por %p62, %p63
      %s66 = sadd.s32 %s65, 1
      %p69 = scmp.eq.s32.totalorder %s31, 1
      %p70 = scmp.ne.s32.totalorder %s65, %s67
      %p71 = scmp.eq.s32.totalorder %s31, 0
      %p72 = por %p70, %p71
      %p73 = scmp.ne.s32.totalorder %s65, %s67
      %p74 = scmp.eq.s32.totalorder %s36, 1
      %p75 = por %p73, %p74
      %p76 = scmp.ne.s32.totalorder %s67, %s68
      %p77 = scmp.eq.s32.totalorder %s36, 0
      %p78 = por %p76, %p77
      %p79 = scmp.ne.s32.totalorder %s67, %s68
      %p80 = scmp.eq.s32.totalorder %s37, 1
      %p81 = por %p79, %p80
      %p83 = scmp.ne.s32.totalorder %s68, %s82
      %p84 = scmp.eq.s32.totalorder %s37, 0
      %p85 = por %p83, %p84
      %s87 = sadd.s32 %s86, 1
      %p90 = scmp.eq.s32.totalorder %s31, 1
      %p91 = scmp.ne.s32.totalorder %s86, %s88
      %p92 = scmp.eq.s32.totalorder %s31, 0
      %p93 = por %p91, %p92
      %p94 = scmp.ne.s32.totalorder %s86, %s88
      %p95 = scmp.eq.s32.totalorder %s36, 1
      %p96 = por %p94, %p95
      %p97 = scmp.ne.s32.totalorder %s88, %s89
      %p98 = scmp.eq.s32.totalorder %s36, 0
      %p99 = por %p97, %p98
      %p100 = scmp.ne.s32.totalorder %s88, %s89
      %p101 = scmp.eq.s32.totalorder %s37, 1
      %p102 = por %p100, %p101
      %p104 = scmp.ne.s32.totalorder %s89, %s103
      %p105 = scmp.eq.s32.totalorder %s37, 0
      %p106 = por %p104, %p105
      %s108 = sadd.s32 %s107, 1
      %p111 = scmp.eq.s32.totalorder %s31, 1
      %p112 = scmp.ne.s32.totalorder %s107, %s109
      %p113 = scmp.eq.s32.totalorder %s31, 0
      %p114 = por %p112, %p113
      %p115 = scmp.ne.s32.totalorder %s107, %s109
      %p116 = scmp.eq.s32.totalorder %s36, 1
      %p117 = por %p115, %p116
      %p118 = scmp.ne.s32.totalorder %s109, %s110
      %p119 = scmp.eq.s32.totalorder %s36, 0
      %p120 = por %p118, %p119
      %p121 = scmp.ne.s32.totalorder %s109, %s110
      %p122 = scmp.eq.s32.totalorder %s37, 1
      %p123 = por %p121, %p122
      %p125 = scmp.ne.s32.totalorder %s110, %s124
      %p126 = scmp.eq.s32.totalorder %s37, 0
      %p127 = por %p125, %p126
      %s129 = sadd.s32 %s128, 1
      %p132 = scmp.eq.s32.totalorder %s31, 1
      %p133 = scmp.ne.s32.totalorder %s128, %s130
      %p134 = scmp.eq.s32.totalorder %s31, 0
      %p135 = por %p133, %p134
      %p136 = scmp.ne.s32.totalorder %s128, %s130
      %p137 = scmp.eq.s32.totalorder %s36, 1
      %p138 = por %p136, %p137
      %p139 = scmp.ne.s32.totalorder %s130, %s131
      %p140 = scmp.eq.s32.totalorder %s36, 0
      %p141 = por %p139, %p140
      %p142 = scmp.ne.s32.totalorder %s130, %s131
      %p143 = scmp.eq.s32.totalorder %s37, 1
      %p144 = por %p142, %p143
      %p146 = scmp.ne.s32.totalorder %s131, %s145
      %p147 = scmp.eq.s32.totalorder %s37, 0
      %p148 = por %p146, %p147
      %s150 = sadd.s32 %s149, 1
      %p153 = scmp.eq.s32.totalorder %s31, 1
      %p154 = scmp.ne.s32.totalorder %s149, %s151
      %p155 = scmp.eq.s32.totalorder %s31, 0
      %p156 = por %p154, %p155
      %p157 = scmp.ne.s32.totalorder %s149, %s151
      %p158 = scmp.eq.s32.totalorder %s36, 1
      %p159 = por %p157, %p158
      %p160 = scmp.ne.s32.totalorder %s151, %s152
      %p161 = scmp.eq.s32.totalorder %s36, 0
      %p162 = por %p160, %p161
      %p163 = scmp.ne.s32.totalorder %s151, %s152
      %p164 = scmp.eq.s32.totalorder %s37, 1
      %p165 = por %p163, %p164
      %p167 = scmp.ne.s32.totalorder %s152, %s166
      %p168 = scmp.eq.s32.totalorder %s37, 0
      %p169 = por %p167, %p168
      %s171 = sadd.s32 %s170, 1
      %p174 = scmp.eq.s32.totalorder %s31, 1
      %p175 = scmp.ne.s32.totalorder %s170, %s172
      %p176 = scmp.eq.s32.totalorder %s31, 0
      %p177 = por %p175, %p176
      %p178 = scmp.ne.s32.totalorder %s170, %s172
      %p179 = scmp.eq.s32.totalorder %s36, 1
      %p180 = por %p178, %p179
      %p181 = scmp.ne.s32.totalorder %s172, %s173
      %p182 = scmp.eq.s32.totalorder %s36, 0
      %p183 = por %p181, %p182
      %p184 = scmp.ne.s32.totalorder %s172, %s173
      %p185 = scmp.eq.s32.totalorder %s37, 1
      %p186 = por %p184, %p185
      %p188 = scmp.ne.s32.totalorder %s173, %s187
      %p189 = scmp.eq.s32.totalorder %s37, 0
      %p190 = por %p188, %p189
      %s192 = sadd.s32 %s191, 1
      %p195 = scmp.eq.s32.totalorder %s31, 1
      %p196 = scmp.ne.s32.totalorder %s191, %s193
      %p197 = scmp.eq.s32.totalorder %s31, 0
      %p198 = por %p196, %p197
      %p199 = scmp.ne.s32.totalorder %s191, %s193
      %p200 = scmp.eq.s32.totalorder %s36, 1
      %p201 = por %p199, %p200
      %p202 = scmp.ne.s32.totalorder %s193, %s194
      %p203 = scmp.eq.s32.totalorder %s36, 0
      %p204 = por %p202, %p203
      %p205 = scmp.ne.s32.totalorder %s193, %s194
      %p206 = scmp.eq.s32.totalorder %s37, 1
      %p207 = por %p205, %p206
      %p209 = scmp.ne.s32.totalorder %s194, %s208
      %p210 = scmp.eq.s32.totalorder %s37, 0
      %p211 = por %p209, %p210
      %s213 = sadd.s32 %s212, 1
      %p216 = scmp.eq.s32.totalorder %s31, 1
      %p217 = scmp.ne.s32.totalorder %s212, %s214
      %p218 = scmp.eq.s32.totalorder %s31, 0
      %p219 = por %p217, %p218
      %p220 = scmp.ne.s32.totalorder %s212, %s214
      %p221 = scmp.eq.s32.totalorder %s36, 1
      %p222 = por %p220, %p221
      %p223 = scmp.ne.s32.totalorder %s214, %s215
      %p224 = scmp.eq.s32.totalorder %s36, 0
      %p225 = por %p223, %p224
      %p226 = scmp.ne.s32.totalorder %s214, %s215
      %p227 = scmp.eq.s32.totalorder %s37, 1
      %p228 = por %p226, %p227
      %p230 = scmp.ne.s32.totalorder %s215, %s229
      %p231 = scmp.eq.s32.totalorder %s37, 0
      %p232 = por %p230, %p231
      %s234 = sadd.s32 %s233, 1
      %p237 = scmp.eq.s32.totalorder %s31, 1
      %p238 = scmp.ne.s32.totalorder %s233, %s235
      %p239 = scmp.eq.s32.totalorder %s31, 0
      %p240 = por %p238, %p239
      %p241 = scmp.ne.s32.totalorder %s233, %s235
      %p242 = scmp.eq.s32.totalorder %s36, 1
      %p243 = por %p241, %p242
      %p244 = scmp.ne.s32.totalorder %s235, %s236
      %p245 = scmp.eq.s32.totalorder %s36, 0
      %p246 = por %p244, %p245
      %p247 = scmp.ne.s32.totalorder %s235, %s236
      %p248 = scmp.eq.s32.totalorder %s37, 1
      %p249 = por %p247, %p248
      %p251 = scmp.ne.s32.totalorder %s236, %s250
      %p252 = scmp.eq.s32.totalorder %s37, 0
      %p253 = por %p251, %p252
      %s255 = sadd.s32 %s254, 1
      %p258 = scmp.eq.s32.totalorder %s31, 1
      %p259 = scmp.ne.s32.totalorder %s254, %s256
      %p260 = scmp.eq.s32.totalorder %s31, 0
      %p261 = por %p259, %p260
      %p262 = scmp.ne.s32.totalorder %s254, %s256
      %p263 = scmp.eq.s32.totalorder %s36, 1
      %p264 = por %p262, %p263
      %p265 = scmp.ne.s32.totalorder %s256, %s257
      %p266 = scmp.eq.s32.totalorder %s36, 0
      %p267 = por %p265, %p266
      %p268 = scmp.ne.s32.totalorder %s256, %s257
      %p269 = scmp.eq.s32.totalorder %s37, 1
      %p270 = por %p268, %p269
      %p272 = scmp.ne.s32.totalorder %s257, %s271
      %p273 = scmp.eq.s32.totalorder %s37, 0
      %p274 = por %p272, %p273
      %s275 = ssub.s32 %s31, %s38
      %p276 = scmp.eq.s32.totalorder %s275, 0
      %s278 = sadd.s32 %s277, 1
      %s279 = scalar_select %p276, %s277, %s278
      %p282 = pneg %p276
      %p283 = scmp.eq.s32.totalorder %s31, 1
      %p284 = por %p282, %p283
      %p285 = scmp.ne.s32.totalorder %s277, %s280
      %p286 = scmp.eq.s32.totalorder %s31, 0
      %p287 = por %p285, %p286
      %p288 = scmp.ne.s32.totalorder %s277, %s280
      %p289 = scmp.eq.s32.totalorder %s36, 1
      %p290 = por %p288, %p289
      %p291 = scmp.ne.s32.totalorder %s280, %s281
      %p292 = scmp.eq.s32.totalorder %s36, 0
      %p293 = por %p291, %p292
      %p294 = scmp.ne.s32.totalorder %s280, %s281
      %p295 = scmp.eq.s32.totalorder %s37, 1
      %p296 = por %p294, %p295
      %p298 = scmp.ne.s32.totalorder %s281, %s297
      %p299 = scmp.eq.s32.totalorder %s37, 0
      %p300 = por %p298, %p299
      %s301 = ssub.s32 %s31, %s38
      %p302 = scmp.eq.s32.totalorder %s301, 0
      %s304 = sadd.s32 %s303, 1
      %s305 = scalar_select %p302, %s303, %s304
      %p308 = pneg %p302
      %p309 = scmp.eq.s32.totalorder %s31, 1
      %p310 = por %p308, %p309
      %p311 = scmp.ne.s32.totalorder %s303, %s306
      %p312 = scmp.eq.s32.totalorder %s31, 0
      %p313 = por %p311, %p312
      %p314 = scmp.ne.s32.totalorder %s303, %s306
      %p315 = scmp.eq.s32.totalorder %s36, 1
      %p316 = por %p314, %p315
      %p317 = scmp.ne.s32.totalorder %s306, %s307
      %p318 = scmp.eq.s32.totalorder %s36, 0
      %p319 = por %p317, %p318
      %p320 = scmp.ne.s32.totalorder %s306, %s307
      %p321 = scmp.eq.s32.totalorder %s37, 1
      %p322 = por %p320, %p321
      %p324 = scmp.ne.s32.totalorder %s307, %s323
      %p325 = scmp.eq.s32.totalorder %s37, 0
      %p326 = por %p324, %p325
      %p327 = scmp.le.s32.totalorder 1, %s31
      %p328 = scmp.lt.s32.totalorder %s31, 3
      %p329 = pnand %p327, %p328
      %p330 = pneg %p329
      // Predicated region
      $region9: #{tpu_custom_call.1} parent=5 // pred_check
        _
      $region10: #{tpu_custom_call.1} parent=5 // pred_check_branch
        %332 = sbr.rel (%p329) target = $region12
      $region11: #{tpu_custom_call.1} parent=5 // pred_region
        %s333 = ssub.s32 %s31, 1
        // Predicated region
        $region13: #{tpu_custom_call.1} parent=11 // pred_check
          %p334 = pneg %p78
        $region14: #{tpu_custom_call.1} parent=11 // pred_check_branch
          %336 = sbr.rel (%p334) target = $region16
        $region15: #{tpu_custom_call.1} parent=11 // pred_region
          %s338 = ssub.s32 2048, 2048
          %339 = vsyncadd [#allocation6], %s338
          %s340 = sshll.u32 [#allocation5], 4
          %s341 = int_to_ptr.vmem [resolvable:$true] %s340
          %346 = dma.hbm_to_vmem [thread:$0]  %s1, 2048, %s341, [#allocation6], 64, 64, 4
        $region16: #{tpu_custom_call.1} parent=11 // pred_fallthru
          _
        // Predicated region
        $region17: #{tpu_custom_call.1} parent=11 // pred_check
          %p347 = pneg %p99
        $region18: #{tpu_custom_call.1} parent=11 // pred_check_branch
          %349 = sbr.rel (%p347) target = $region20
        $region19: #{tpu_custom_call.1} parent=11 // pred_region
          _
        $region20: #{tpu_custom_call.1} parent=11 // pred_fallthru
          _
        // Predicated region
        $region21: #{tpu_custom_call.1} parent=11 // pred_check
          %p350 = pneg %p120
        $region22: #{tpu_custom_call.1} parent=11 // pred_check_branch
          %352 = sbr.rel (%p350) target = $region24
        $region23: #{tpu_custom_call.1} parent=11 // pred_region
          %s354 = ssub.s32 1024, 1024
          %355 = vsyncadd [#allocation6], %s354
          %s356 = sshll.u32 [#allocation7], 4
          %s357 = int_to_ptr.vmem [resolvable:$true] %s356
          %362 = dma.hbm_to_vmem [thread:$0]  %s3, 1024, %s357, [#allocation6], 64, 64, 4
        $region24: #{tpu_custom_call.1} parent=11 // pred_fallthru
          _
        // Predicated region
        $region25: #{tpu_custom_call.1} parent=11 // pred_check
          %p363 = pneg %p141
        $region26: #{tpu_custom_call.1} parent=11 // pred_check_branch
          %365 = sbr.rel (%p363) target = $region28
        $region27: #{tpu_custom_call.1} parent=11 // pred_region
          _
        $region28: #{tpu_custom_call.1} parent=11 // pred_fallthru
          _
        // Predicated region
        $region29: #{tpu_custom_call.1} parent=11 // pred_check
          %p366 = pneg %p162
        $region30: #{tpu_custom_call.1} parent=11 // pred_check_branch
          %368 = sbr.rel (%p366) target = $region32
        $region31: #{tpu_custom_call.1} parent=11 // pred_region
          %s370 = ssub.s32 1024, 1024
          %371 = vsyncadd [#allocation9], %s370
          %s372 = sshll.u32 [#allocation8], 4
          %s373 = int_to_ptr.vmem [resolvable:$true] %s372
          %378 = dma.hbm_to_vmem [thread:$0]  %s5, 1024, %s373, [#allocation9], 64, 64, 4
        $region32: #{tpu_custom_call.1} parent=11 // pred_fallthru
          _
        // Predicated region
        $region33: #{tpu_custom_call.1} parent=11 // pred_check
          %p379 = pneg %p183
        $region34: #{tpu_custom_call.1} parent=11 // pred_check_branch
          %381 = sbr.rel (%p379) target = $region36
        $region35: #{tpu_custom_call.1} parent=11 // pred_region
          _
        $region36: #{tpu_custom_call.1} parent=11 // pred_fallthru
          _
        // Predicated region
        $region37: #{tpu_custom_call.1} parent=11 // pred_check
          %p382 = pneg %p204
        $region38: #{tpu_custom_call.1} parent=11 // pred_check_branch
          %384 = sbr.rel (%p382) target = $region40
        $region39: #{tpu_custom_call.1} parent=11 // pred_region
          %s386 = ssub.s32 2048, 2048
          %387 = vsyncadd [#allocation9], %s386
          %s388 = sshll.u32 [#allocation10], 4
          %s389 = int_to_ptr.vmem [resolvable:$true] %s388
          %394 = dma.hbm_to_vmem [thread:$0]  %s7, 2048, %s389, [#allocation9], 128, 128, 8
        $region40: #{tpu_custom_call.1} parent=11 // pred_fallthru
          _
        // Predicated region
        $region41: #{tpu_custom_call.1} parent=11 // pred_check
          %p395 = pneg %p225
        $region42: #{tpu_custom_call.1} parent=11 // pred_check_branch
          %397 = sbr.rel (%p395) target = $region44
        $region43: #{tpu_custom_call.1} parent=11 // pred_region
          _
        $region44: #{tpu_custom_call.1} parent=11 // pred_fallthru
          _
        // Predicated region
        $region45: #{tpu_custom_call.1} parent=11 // pred_check
          %p398 = pneg %p246
        $region46: #{tpu_custom_call.1} parent=11 // pred_check_branch
          %400 = sbr.rel (%p398) target = $region48
        $region47: #{tpu_custom_call.1} parent=11 // pred_region
          %s402 = ssub.s32 2048, 2048
          %403 = vsyncadd [#allocation12], %s402
          %s404 = sshll.u32 [#allocation11], 4
          %s405 = int_to_ptr.vmem [resolvable:$true] %s404
          %410 = dma.hbm_to_vmem [thread:$0]  %s9, 2048, %s405, [#allocation12], 64, 64, 4
        $region48: #{tpu_custom_call.1} parent=11 // pred_fallthru
          _
        // Predicated region
        $region49: #{tpu_custom_call.1} parent=11 // pred_check
          %p411 = pneg %p267
        $region50: #{tpu_custom_call.1} parent=11 // pred_check_branch
          %413 = sbr.rel (%p411) target = $region52
        $region51: #{tpu_custom_call.1} parent=11 // pred_region
          _
        $region52: #{tpu_custom_call.1} parent=11 // pred_fallthru
          _
      $region12: #{tpu_custom_call.1} parent=5 // pred_fallthru
        _
      %p414 = scmp.lt.s32.totalorder %s31, 2
      // Predicated region
      $region53: #{tpu_custom_call.1} parent=5 // pred_check
        %p415 = pneg %p414
      $region54: #{tpu_custom_call.1} parent=5 // pred_check_branch
        %417 = sbr.rel (%p415) target = $region56
      $region55: #{tpu_custom_call.1} parent=5 // pred_region
        // Predicated region
        $region57: #{tpu_custom_call.1} parent=55 // pred_check
          %p418 = pneg %p51
        $region58: #{tpu_custom_call.1} parent=55 // pred_check_branch
          %420 = sbr.rel (%p418) target = $region60
        $region59: #{tpu_custom_call.1} parent=55 // pred_region
          %s421 = sand.u32 %s41, 1
          %s422 = scalar_lea.sflag [#allocation3], %s421
          %s423 = sand.u32 %s41, 1
          %s424 = smul.addr %s423, 256
          %s425 = scalar_lea.vmem [#allocation2], %s424
          %s426 = smul.u32 16, %s31
          %s428 = ssub.s32 4096, 4096
          %429 = vsyncadd %s422, %s428
          %s430 = smul.addr %s426, 2
          %s431 = smul.addr %s430, 128
          %s432 = scalar_lea.hbm %s0, %s431
          %s433 = sshll.u32 %s425, 4
          %s434 = int_to_ptr.vmem [resolvable:$true] %s433
          %439 = dma.hbm_to_vmem [thread:$0]  %s432, 4096, %s434, %s422, 256, 256, 16
        $region60: #{tpu_custom_call.1} parent=55 // pred_fallthru
          _
      $region56: #{tpu_custom_call.1} parent=5 // pred_fallthru
        _
      %p440 = scmp.le.s32.totalorder 1, %s31
      %p441 = scmp.lt.s32.totalorder %s31, 3
      %p442 = pnand %p440, %p441
      %p443 = pneg %p442
      // Predicated region
      $region61: #{tpu_custom_call.1} parent=5 // pred_check
        _
      $region62: #{tpu_custom_call.1} parent=5 // pred_check_branch
        %445 = sbr.rel (%p442) target = $region64
      $region63: #{tpu_custom_call.1} parent=5 // pred_region
        %s446 = ssub.s32 %s31, 1
        %s447 = sand.u32 %s44, 1
        %s448 = scalar_lea.sflag [#allocation3], %s447
        %s449 = sand.u32 %s44, 1
        %s450 = smul.addr %s449, 256
        %s451 = scalar_lea.vmem [#allocation2], %s450
        // Predicated region
        $region65: #{tpu_custom_call.1} parent=63 // pred_check
          %p452 = pneg %p57
        $region66: #{tpu_custom_call.1} parent=63 // pred_check_branch
          %454 = sbr.rel (%p452) target = $region68
        $region67: #{tpu_custom_call.1} parent=63 // pred_region
          %455 = dma.done %s448, 4096
        $region68: #{tpu_custom_call.1} parent=63 // pred_fallthru
          _
        // Predicated region
        $region69: #{tpu_custom_call.1} parent=63 // pred_check
          %p456 = pneg %p78
        $region70: #{tpu_custom_call.1} parent=63 // pred_check_branch
          %458 = sbr.rel (%p456) target = $region72
        $region71: #{tpu_custom_call.1} parent=63 // pred_region
          %459 = dma.done [#allocation6], 2048
        $region72: #{tpu_custom_call.1} parent=63 // pred_fallthru
          _
        // Predicated region
        $region73: #{tpu_custom_call.1} parent=63 // pred_check
          %p460 = pneg %p120
        $region74: #{tpu_custom_call.1} parent=63 // pred_check_branch
          %462 = sbr.rel (%p460) target = $region76
        $region75: #{tpu_custom_call.1} parent=63 // pred_region
          %463 = dma.done [#allocation6], 1024
        $region76: #{tpu_custom_call.1} parent=63 // pred_fallthru
          _
        // Predicated region
        $region77: #{tpu_custom_call.1} parent=63 // pred_check
          %p464 = pneg %p162
        $region78: #{tpu_custom_call.1} parent=63 // pred_check_branch
          %466 = sbr.rel (%p464) target = $region80
        $region79: #{tpu_custom_call.1} parent=63 // pred_region
          %467 = dma.done [#allocation9], 1024
        $region80: #{tpu_custom_call.1} parent=63 // pred_fallthru
          _
        // Predicated region
        $region81: #{tpu_custom_call.1} parent=63 // pred_check
          %p468 = pneg %p204
        $region82: #{tpu_custom_call.1} parent=63 // pred_check_branch
          %470 = sbr.rel (%p468) target = $region84
        $region83: #{tpu_custom_call.1} parent=63 // pred_region
          %471 = dma.done [#allocation9], 2048
        $region84: #{tpu_custom_call.1} parent=63 // pred_fallthru
          _
        // Predicated region
        $region85: #{tpu_custom_call.1} parent=63 // pred_check
          %p472 = pneg %p246
        $region86: #{tpu_custom_call.1} parent=63 // pred_check_branch
          %474 = sbr.rel (%p472) target = $region88
        $region87: #{tpu_custom_call.1} parent=63 // pred_region
          %475 = dma.done [#allocation12], 2048
        $region88: #{tpu_custom_call.1} parent=63 // pred_fallthru
          _
        %s476 = sand.u32 %s44, 1
        %s477 = scalar_lea.sflag [#allocation3], %s476
        %s478 = sand.u32 %s44, 1
        %s479 = smul.addr %s478, 256
        %s480 = scalar_lea.vmem [#allocation2], %s479
        %p481 = pneg %p57
        %p482 = pneg %p54
        %p483 = pneg %p78
        %p484 = pneg %p75
        %p485 = pneg %p99
        %p486 = pneg %p96
        %p487 = pneg %p120
        %p488 = pneg %p117
        %p489 = pneg %p141
        %p490 = pneg %p138
        %p491 = pneg %p162
        %p492 = pneg %p159
        %p493 = pneg %p183
        %p494 = pneg %p180
        %p495 = pneg %p204
        %p496 = pneg %p201
        %p497 = pneg %p225
        %p498 = pneg %p222
        %p499 = pneg %p246
        %p500 = pneg %p243
        %p501 = pneg %p267
        %p502 = pneg %p264
        %p503 = pneg %p293
        %p504 = pneg %p290
        %s505 = sand.u32 %s280, 1
        %s506 = scalar_lea.sflag [#allocation4], %s505
        %s507 = sand.u32 %s280, 1
        %s508 = smul.addr %s507, 128
        %s509 = scalar_lea.vmem [#allocation13], %s508
        %p510 = pneg %p319
        %p511 = pneg %p316
        %s512 = sand.u32 %s306, 1
        %s513 = scalar_lea.sflag [#allocation15], %s512
        %s514 = sand.u32 %s306, 1
        %s515 = smul.addr %s514, 8
        %s516 = scalar_lea.vmem [#allocation14], %s515
        %s517 = smul.u32 16, %s36
        %s518 = smul.u32 16, %s36
        %v520 = vld [vmem:[%s451] sm:$0xff]
        %v521 = vld [vmem:[%s451 + $0x8] sm:$0xff]
        %v522 = vld [vmem:[%s451 + $0x10] sm:$0xff]
        %v523 = vld [vmem:[%s451 + $0x18] sm:$0xff]
        %v524 = vld [vmem:[%s451 + $0x20] sm:$0xff]
        %v525 = vld [vmem:[%s451 + $0x28] sm:$0xff]
        %v526 = vld [vmem:[%s451 + $0x30] sm:$0xff]
        %v527 = vld [vmem:[%s451 + $0x38] sm:$0xff]
        %v528 = vld [vmem:[%s451 + $0x40] sm:$0xff]
        %v529 = vld [vmem:[%s451 + $0x48] sm:$0xff]
        %v530 = vld [vmem:[%s451 + $0x50] sm:$0xff]
        %v531 = vld [vmem:[%s451 + $0x58] sm:$0xff]
        %v532 = vld [vmem:[%s451 + $0x60] sm:$0xff]
        %v533 = vld [vmem:[%s451 + $0x68] sm:$0xff]
        %v534 = vld [vmem:[%s451 + $0x70] sm:$0xff]
        %v535 = vld [vmem:[%s451 + $0x78] sm:$0xff]
        %v536 = vld [vmem:[%s451 + $0x80] sm:$0xff]
        %v537 = vld [vmem:[%s451 + $0x88] sm:$0xff]
        %v538 = vld [vmem:[%s451 + $0x90] sm:$0xff]
        %v539 = vld [vmem:[%s451 + $0x98] sm:$0xff]
        %v540 = vld [vmem:[%s451 + $0xa0] sm:$0xff]
        %v541 = vld [vmem:[%s451 + $0xa8] sm:$0xff]
        %v542 = vld [vmem:[%s451 + $0xb0] sm:$0xff]
        %v543 = vld [vmem:[%s451 + $0xb8] sm:$0xff]
        %v544 = vld [vmem:[%s451 + $0xc0] sm:$0xff]
        %v545 = vld [vmem:[%s451 + $0xc8] sm:$0xff]
        %v546 = vld [vmem:[%s451 + $0xd0] sm:$0xff]
        %v547 = vld [vmem:[%s451 + $0xd8] sm:$0xff]
        %v548 = vld [vmem:[%s451 + $0xe0] sm:$0xff]
        %v549 = vld [vmem:[%s451 + $0xe8] sm:$0xff]
        %v550 = vld [vmem:[%s451 + $0xf0] sm:$0xff]
        %v551 = vld [vmem:[%s451 + $0xf8] sm:$0xff]
        %v552 = vpack.c.bf16 %v522, %v520
        %v553 = vpack.c.bf16 %v523, %v521
        %v554 = vpack.c.bf16 %v526, %v524
        %v555 = vpack.c.bf16 %v527, %v525
        %v556 = vpack.c.bf16 %v530, %v528
        %v557 = vpack.c.bf16 %v531, %v529
        %v558 = vpack.c.bf16 %v534, %v532
        %v559 = vpack.c.bf16 %v535, %v533
        %v560 = vpack.c.bf16 %v538, %v536
        %v561 = vpack.c.bf16 %v539, %v537
        %v562 = vpack.c.bf16 %v542, %v540
        %v563 = vpack.c.bf16 %v543, %v541
        %v564 = vpack.c.bf16 %v546, %v544
        %v565 = vpack.c.bf16 %v547, %v545
        %v566 = vpack.c.bf16 %v550, %v548
        %v567 = vpack.c.bf16 %v551, %v549
        %v568 = vld [vmem:[#allocation5] sm:$0xf]
        %v569 = vld [vmem:[#allocation5 + $0x4] sm:$0xf]
        %v570 = vld [vmem:[#allocation5 + $0x8] sm:$0xf]
        %v571 = vld [vmem:[#allocation5 + $0xc] sm:$0xf]
        %v572 = vld [vmem:[#allocation5 + $0x10] sm:$0xf]
        %v573 = vld [vmem:[#allocation5 + $0x14] sm:$0xf]
        %v574 = vld [vmem:[#allocation5 + $0x18] sm:$0xf]
        %v575 = vld [vmem:[#allocation5 + $0x1c] sm:$0xf]
        %v576 = vld [vmem:[#allocation5 + $0x20] sm:$0xf]
        %v577 = vld [vmem:[#allocation5 + $0x24] sm:$0xf]
        %v578 = vld [vmem:[#allocation5 + $0x28] sm:$0xf]
        %v579 = vld [vmem:[#allocation5 + $0x2c] sm:$0xf]
        %v580 = vld [vmem:[#allocation5 + $0x30] sm:$0xf]
        %v581 = vld [vmem:[#allocation5 + $0x34] sm:$0xf]
        %v582 = vld [vmem:[#allocation5 + $0x38] sm:$0xf]
        %v583 = vld [vmem:[#allocation5 + $0x3c] sm:$0xf]
        %v584 = vld [vmem:[#allocation5 + $0x40] sm:$0xf]
        %v585 = vld [vmem:[#allocation5 + $0x44] sm:$0xf]
        %v586 = vld [vmem:[#allocation5 + $0x48] sm:$0xf]
        %v587 = vld [vmem:[#allocation5 + $0x4c] sm:$0xf]
        %v588 = vld [vmem:[#allocation5 + $0x50] sm:$0xf]
        %v589 = vld [vmem:[#allocation5 + $0x54] sm:$0xf]
        %v590 = vld [vmem:[#allocation5 + $0x58] sm:$0xf]
        %v591 = vld [vmem:[#allocation5 + $0x5c] sm:$0xf]
        %v592 = vld [vmem:[#allocation5 + $0x60] sm:$0xf]
        %v593 = vld [vmem:[#allocation5 + $0x64] sm:$0xf]
        %v594 = vld [vmem:[#allocation5 + $0x68] sm:$0xf]
        %v595 = vld [vmem:[#allocation5 + $0x6c] sm:$0xf]
        %v596 = vld [vmem:[#allocation5 + $0x70] sm:$0xf]
        %v597 = vld [vmem:[#allocation5 + $0x74] sm:$0xf]
        %v598 = vld [vmem:[#allocation5 + $0x78] sm:$0xf]
        %v599 = vld [vmem:[#allocation5 + $0x7c] sm:$0xf]
        %v600 = vld [vmem:[%s2] sm:$0x1]
        %v602 = vlaneseq
        %v603 = vshrl.u32 %v602, 7
        %v604 = vsub.s32 0, %v603
        %v605 = vrot.slane %v600, %v604
        %v639 = vunpack.c.l.b16 %v568
        %v640 = vunpack.c.l.b16 %v569
        %v641 = vunpack.c.l.b16 %v570
        %v642 = vunpack.c.l.b16 %v571
        %v643 = vunpack.c.l.b16 %v572
        %v644 = vunpack.c.l.b16 %v573
        %v645 = vunpack.c.l.b16 %v574
        %v646 = vunpack.c.l.b16 %v575
        %v647 = vunpack.c.l.b16 %v576
        %v648 = vunpack.c.l.b16 %v577
        %v649 = vunpack.c.l.b16 %v578
        %v650 = vunpack.c.l.b16 %v579
        %v651 = vunpack.c.l.b16 %v580
        %v652 = vunpack.c.l.b16 %v581
        %v653 = vunpack.c.l.b16 %v582
        %v654 = vunpack.c.l.b16 %v583
        %v655 = vunpack.c.l.b16 %v584
        %v656 = vunpack.c.l.b16 %v585
        %v657 = vunpack.c.l.b16 %v586
        %v658 = vunpack.c.l.b16 %v587
        %v659 = vunpack.c.l.b16 %v588
        %v660 = vunpack.c.l.b16 %v589
        %v661 = vunpack.c.l.b16 %v590
        %v662 = vunpack.c.l.b16 %v591
        %v663 = vunpack.c.l.b16 %v592
        %v664 = vunpack.c.l.b16 %v593
        %v665 = vunpack.c.l.b16 %v594
        %v666 = vunpack.c.l.b16 %v595
        %v667 = vunpack.c.l.b16 %v596
        %v668 = vunpack.c.l.b16 %v597
        %v669 = vunpack.c.l.b16 %v598
        %v670 = vunpack.c.l.b16 %v599
        %v671 = vpack.c.b16 %v640, %v639
        %v672 = vpack.c.b16 %v642, %v641
        %v673 = vpack.c.b16 %v644, %v643
        %v674 = vpack.c.b16 %v646, %v645
        %v675 = vpack.c.b16 %v648, %v647
        %v676 = vpack.c.b16 %v650, %v649
        %v677 = vpack.c.b16 %v652, %v651
        %v678 = vpack.c.b16 %v654, %v653
        %v679 = vpack.c.b16 %v656, %v655
        %v680 = vpack.c.b16 %v658, %v657
        %v681 = vpack.c.b16 %v660, %v659
        %v682 = vpack.c.b16 %v662, %v661
        %v683 = vpack.c.b16 %v664, %v663
        %v684 = vpack.c.b16 %v666, %v665
        %v685 = vpack.c.b16 %v668, %v667
        %v686 = vpack.c.b16 %v670, %v669
        %703 = vmatprep.subr.bf16.mxu0 0
        %704 = vmatpush1.bf16.msra.mxu0 %v678
        %705 = vmatprep.subr.bf16.mxu0 0
        %706 = vmatpush1.bf16.msra.mxu0 %v677
        %707 = vmatprep.subr.bf16.mxu0 0
        %708 = vmatpush1.bf16.msra.mxu0 %v676
        %709 = vmatprep.subr.bf16.mxu0 0
        %710 = vmatpush1.bf16.msra.mxu0 %v675
        %711 = vmatprep.subr.bf16.mxu0 0
        %712 = vmatpush1.bf16.msra.mxu0 %v674
        %713 = vmatprep.subr.bf16.mxu0 0
        %714 = vmatpush1.bf16.msra.mxu0 %v673
        %715 = vmatprep.subr.bf16.mxu0 0
        %716 = vmatpush1.bf16.msra.mxu0 %v672
        %717 = vmatprep.subr.bf16.mxu0 0
        %718 = vmatpush1.bf16.msra.mxu0 %v671
        %719 = vmatprep.subr.bf16.mxu0 0
        %720 = vmatpush2.bf16.msra.mxu0 %v686
        %721 = vmatprep.subr.bf16.mxu0 0
        %722 = vmatpush2.bf16.msra.mxu0 %v685
        %723 = vmatprep.subr.bf16.mxu0 0
        %724 = vmatpush2.bf16.msra.mxu0 %v684
        %725 = vmatprep.subr.bf16.mxu0 0
        %726 = vmatpush2.bf16.msra.mxu0 %v683
        %727 = vmatprep.subr.bf16.mxu0 0
        %728 = vmatpush2.bf16.msra.mxu0 %v682
        %729 = vmatprep.subr.bf16.mxu0 0
        %730 = vmatpush2.bf16.msra.mxu0 %v681
        %731 = vmatprep.subr.bf16.mxu0 0
        %732 = vmatpush2.bf16.msra.mxu0 %v680
        %733 = vmatprep.subr.bf16.mxu0 0
        %734 = vmatpush2.bf16.msra.mxu0 %v679
        %735 = vmatprep.mubr.bf16.mxu0 %v553
        %736 = vmatmul.mubr.bf16.gmra.mxu0 %v552
        %v737 = vpop.f32.mrf.mxu0
        %v738 = vadd.f32 %v605, %v737
        %v739 = vpop.f32.mrf.mxu0
        %v740 = vpop.f32.mrf.mxu0
        %v741 = vadd.f32 %v605, %v740
        %v742 = vpop.f32.mrf.mxu0
        %743 = vmatprep.mubr.bf16.mxu0 %v555
        %744 = vmatmul.mubr.bf16.gmra.mxu0 %v554
        %v745 = vpop.f32.mrf.mxu0
        %v746 = vadd.f32 %v605, %v745
        %v747 = vpop.f32.mrf.mxu0
        %v748 = vpop.f32.mrf.mxu0
        %v749 = vadd.f32 %v605, %v748
        %v750 = vpop.f32.mrf.mxu0
        %751 = vmatprep.mubr.bf16.mxu0 %v557
        %752 = vmatmul.mubr.bf16.gmra.mxu0 %v556
        %v753 = vpop.f32.mrf.mxu0
        %v754 = vadd.f32 %v605, %v753
        %v755 = vpop.f32.mrf.mxu0
        %v756 = vpop.f32.mrf.mxu0
        %v757 = vadd.f32 %v605, %v756
        %v758 = vpop.f32.mrf.mxu0
        %759 = vmatprep.mubr.bf16.mxu0 %v559
        %760 = vmatmul.mubr.bf16.gmra.mxu0 %v558
        %v761 = vpop.f32.mrf.mxu0
        %v762 = vadd.f32 %v605, %v761
        %v763 = vpop.f32.mrf.mxu0
        %v764 = vpop.f32.mrf.mxu0
        %v765 = vadd.f32 %v605, %v764
        %v766 = vpop.f32.mrf.mxu0
        %767 = vmatprep.mubr.bf16.mxu0 %v561
        %768 = vmatmul.mubr.bf16.gmra.mxu0 %v560
        %v769 = vpop.f32.mrf.mxu0
        %v770 = vadd.f32 %v605, %v769
        %v771 = vpop.f32.mrf.mxu0
        %v772 = vpop.f32.mrf.mxu0
        %v773 = vadd.f32 %v605, %v772
        %v774 = vpop.f32.mrf.mxu0
        %775 = vmatprep.mubr.bf16.mxu0 %v563
        %776 = vmatmul.mubr.bf16.gmra.mxu0 %v562
        %v777 = vpop.f32.mrf.mxu0
        %v778 = vadd.f32 %v605, %v777
        %v779 = vpop.f32.mrf.mxu0
        %v780 = vpop.f32.mrf.mxu0
        %v781 = vadd.f32 %v605, %v780
        %v782 = vpop.f32.mrf.mxu0
        %783 = vmatprep.mubr.bf16.mxu0 %v565
        %784 = vmatmul.mubr.bf16.gmra.mxu0 %v564
        %v785 = vpop.f32.mrf.mxu0
        %v786 = vadd.f32 %v605, %v785
        %v787 = vpop.f32.mrf.mxu0
        %v788 = vpop.f32.mrf.mxu0
        %v789 = vadd.f32 %v605, %v788
        %v790 = vpop.f32.mrf.mxu0
        %791 = vmatprep.mubr.bf16.mxu0 %v567
        %792 = vmatmul.mubr.bf16.gmra.mxu0 %v566
        %v793 = vpop.f32.mrf.mxu0
        %v794 = vadd.f32 %v605, %v793
        %v795 = vpop.f32.mrf.mxu0
        %v796 = vpop.f32.mrf.mxu0
        %v797 = vadd.f32 %v605, %v796
        %v798 = vpop.f32.mrf.mxu0
        %799 = vdwg.mxu0
        %v800 = vmax.f32 %v738, 0.0
        %v801 = vmax.f32 %v741, 0.0
        %v802 = vmax.f32 %v746, 0.0
        %v803 = vmax.f32 %v749, 0.0
        %v804 = vmax.f32 %v754, 0.0
        %v805 = vmax.f32 %v757, 0.0
        %v806 = vmax.f32 %v762, 0.0
        %v807 = vmax.f32 %v765, 0.0
        %v808 = vmax.f32 %v770, 0.0
        %v809 = vmax.f32 %v773, 0.0
        %v810 = vmax.f32 %v778, 0.0
        %v811 = vmax.f32 %v781, 0.0
        %v812 = vmax.f32 %v786, 0.0
        %v813 = vmax.f32 %v789, 0.0
        %v814 = vmax.f32 %v794, 0.0
        %v815 = vmax.f32 %v797, 0.0
        %v816 = vpack.c.bf16 %v801, %v800
        %v817 = vpack.c.bf16 %v803, %v802
        %v818 = vpack.c.bf16 %v805, %v804
        %v819 = vpack.c.bf16 %v807, %v806
        %v820 = vpack.c.bf16 %v809, %v808
        %v821 = vpack.c.bf16 %v811, %v810
        %v822 = vpack.c.bf16 %v813, %v812
        %v823 = vpack.c.bf16 %v815, %v814
        %v824 = vld [vmem:[#allocation7] sm:$0xf]
        %v825 = vld [vmem:[#allocation7 + $0x4] sm:$0xf]
        %v826 = vld [vmem:[#allocation7 + $0x8] sm:$0xf]
        %v827 = vld [vmem:[#allocation7 + $0xc] sm:$0xf]
        %v828 = vld [vmem:[#allocation7 + $0x10] sm:$0xf]
        %v829 = vld [vmem:[#allocation7 + $0x14] sm:$0xf]
        %v830 = vld [vmem:[#allocation7 + $0x18] sm:$0xf]
        %v831 = vld [vmem:[#allocation7 + $0x1c] sm:$0xf]
        %v832 = vld [vmem:[#allocation7 + $0x20] sm:$0xf]
        %v833 = vld [vmem:[#allocation7 + $0x24] sm:$0xf]
        %v834 = vld [vmem:[#allocation7 + $0x28] sm:$0xf]
        %v835 = vld [vmem:[#allocation7 + $0x2c] sm:$0xf]
        %v836 = vld [vmem:[#allocation7 + $0x30] sm:$0xf]
        %v837 = vld [vmem:[#allocation7 + $0x34] sm:$0xf]
        %v838 = vld [vmem:[#allocation7 + $0x38] sm:$0xf]
        %v839 = vld [vmem:[#allocation7 + $0x3c] sm:$0xf]
        %v840 = vld [vmem:[%s4] sm:$0x1]
        %v842 = vlaneseq
        %v843 = vshrl.u32 %v842, 7
        %v844 = vsub.s32 0, %v843
        %v845 = vrot.slane %v840, %v844
        %v863 = vunpack.c.l.b16 %v824
        %v864 = vunpack.c.l.b16 %v825
        %v865 = vunpack.c.l.b16 %v826
        %v866 = vunpack.c.l.b16 %v827
        %v867 = vunpack.c.l.b16 %v828
        %v868 = vunpack.c.l.b16 %v829
        %v869 = vunpack.c.l.b16 %v830
        %v870 = vunpack.c.l.b16 %v831
        %v871 = vunpack.c.l.b16 %v832
        %v872 = vunpack.c.l.b16 %v833
        %v873 = vunpack.c.l.b16 %v834
        %v874 = vunpack.c.l.b16 %v835
        %v875 = vunpack.c.l.b16 %v836
        %v876 = vunpack.c.l.b16 %v837
        %v877 = vunpack.c.l.b16 %v838
        %v878 = vunpack.c.l.b16 %v839
        %v879 = vpack.c.b16 %v864, %v863
        %v880 = vpack.c.b16 %v866, %v865
        %v881 = vpack.c.b16 %v868, %v867
        %v882 = vpack.c.b16 %v870, %v869
        %v883 = vpack.c.b16 %v872, %v871
        %v884 = vpack.c.b16 %v874, %v873
        %v885 = vpack.c.b16 %v876, %v875
        %v886 = vpack.c.b16 %v878, %v877
        %895 = vmatprep.subr.bf16.mxu0 0
        %896 = vmatpush1.bf16.msra.mxu0 %v886
        %897 = vmatprep.subr.bf16.mxu0 0
        %898 = vmatpush1.bf16.msra.mxu0 %v885
        %899 = vmatprep.subr.bf16.mxu0 0
        %900 = vmatpush1.bf16.msra.mxu0 %v884
        %901 = vmatprep.subr.bf16.mxu0 0
        %902 = vmatpush1.bf16.msra.mxu0 %v883
        %903 = vmatprep.subr.bf16.mxu0 0
        %904 = vmatpush1.bf16.msra.mxu0 %v882
        %905 = vmatprep.subr.bf16.mxu0 0
        %906 = vmatpush1.bf16.msra.mxu0 %v881
        %907 = vmatprep.subr.bf16.mxu0 0
        %908 = vmatpush1.bf16.msra.mxu0 %v880
        %909 = vmatprep.subr.bf16.mxu0 0
        %910 = vmatpush1.bf16.msra.mxu0 %v879
        %911 = vmatprep.subr.bf16.mxu0 0
        %912 = vmatpush2.bf16.msra.mxu0 0
        %913 = vmatprep.subr.bf16.mxu0 0
        %914 = vmatpush2.bf16.msra.mxu0 0
        %915 = vmatprep.subr.bf16.mxu0 0
        %916 = vmatpush2.bf16.msra.mxu0 0
        %917 = vmatprep.subr.bf16.mxu0 0
        %918 = vmatpush2.bf16.msra.mxu0 0
        %919 = vmatprep.subr.bf16.mxu0 0
        %920 = vmatpush2.bf16.msra.mxu0 0
        %921 = vmatprep.subr.bf16.mxu0 0
        %922 = vmatpush2.bf16.msra.mxu0 0
        %923 = vmatprep.subr.bf16.mxu0 0
        %924 = vmatpush2.bf16.msra.mxu0 0
        %925 = vmatprep.subr.bf16.mxu0 0
        %926 = vmatpush2.bf16.msra.mxu0 0
        %927 = vmatprep.mubr.bf16.mxu0 0
        %928 = vmatmul.mubr.bf16.gmra.mxu0 %v816
        %v929 = vpop.f32.mrf.mxu0
        %v930 = vadd.f32 %v845, %v929
        %v931 = vpop.f32.mrf.mxu0
        %v932 = vpop.f32.mrf.mxu0
        %v933 = vadd.f32 %v845, %v932
        %v934 = vpop.f32.mrf.mxu0
        %935 = vmatprep.mubr.bf16.mxu0 0
        %936 = vmatmul.mubr.bf16.gmra.mxu0 %v817
        %v937 = vpop.f32.mrf.mxu0
        %v938 = vadd.f32 %v845, %v937
        %v939 = vpop.f32.mrf.mxu0
        %v940 = vpop.f32.mrf.mxu0
        %v941 = vadd.f32 %v845, %v940
        %v942 = vpop.f32.mrf.mxu0
        %943 = vmatprep.mubr.bf16.mxu0 0
        %944 = vmatmul.mubr.bf16.gmra.mxu0 %v818
        %v945 = vpop.f32.mrf.mxu0
        %v946 = vadd.f32 %v845, %v945
        %v947 = vpop.f32.mrf.mxu0
        %v948 = vpop.f32.mrf.mxu0
        %v949 = vadd.f32 %v845, %v948
        %v950 = vpop.f32.mrf.mxu0
        %951 = vmatprep.mubr.bf16.mxu0 0
        %952 = vmatmul.mubr.bf16.gmra.mxu0 %v819
        %v953 = vpop.f32.mrf.mxu0
        %v954 = vadd.f32 %v845, %v953
        %v955 = vpop.f32.mrf.mxu0
        %v956 = vpop.f32.mrf.mxu0
        %v957 = vadd.f32 %v845, %v956
        %v958 = vpop.f32.mrf.mxu0
        %959 = vmatprep.mubr.bf16.mxu0 0
        %960 = vmatmul.mubr.bf16.gmra.mxu0 %v820
        %v961 = vpop.f32.mrf.mxu0
        %v962 = vadd.f32 %v845, %v961
        %v963 = vpop.f32.mrf.mxu0
        %v964 = vpop.f32.mrf.mxu0
        %v965 = vadd.f32 %v845, %v964
        %v966 = vpop.f32.mrf.mxu0
        %967 = vmatprep.mubr.bf16.mxu0 0
        %968 = vmatmul.mubr.bf16.gmra.mxu0 %v821
        %v969 = vpop.f32.mrf.mxu0
        %v970 = vadd.f32 %v845, %v969
        %v971 = vpop.f32.mrf.mxu0
        %v972 = vpop.f32.mrf.mxu0
        %v973 = vadd.f32 %v845, %v972
        %v974 = vpop.f32.mrf.mxu0
        %975 = vmatprep.mubr.bf16.mxu0 0
        %976 = vmatmul.mubr.bf16.gmra.mxu0 %v822
        %v977 = vpop.f32.mrf.mxu0
        %v978 = vadd.f32 %v845, %v977
        %v979 = vpop.f32.mrf.mxu0
        %v980 = vpop.f32.mrf.mxu0
        %v981 = vadd.f32 %v845, %v980
        %v982 = vpop.f32.mrf.mxu0
        %983 = vmatprep.mubr.bf16.mxu0 0
        %984 = vmatmul.mubr.bf16.gmra.mxu0 %v823
        %v985 = vpop.f32.mrf.mxu0
        %v986 = vadd.f32 %v845, %v985
        %v987 = vpop.f32.mrf.mxu0
        %v988 = vpop.f32.mrf.mxu0
        %v989 = vadd.f32 %v845, %v988
        %v990 = vpop.f32.mrf.mxu0
        %991 = vdwg.mxu0
        %v992 = vmax.f32 %v930, 0.0
        %v993 = vmax.f32 %v933, 0.0
        %v994 = vmax.f32 %v938, 0.0
        %v995 = vmax.f32 %v941, 0.0
        %v996 = vmax.f32 %v946, 0.0
        %v997 = vmax.f32 %v949, 0.0
        %v998 = vmax.f32 %v954, 0.0
        %v999 = vmax.f32 %v957, 0.0
        %v1000 = vmax.f32 %v962, 0.0
        %v1001 = vmax.f32 %v965, 0.0
        %v1002 = vmax.f32 %v970, 0.0
        %v1003 = vmax.f32 %v973, 0.0
        %v1004 = vmax.f32 %v978, 0.0
        %v1005 = vmax.f32 %v981, 0.0
        %v1006 = vmax.f32 %v986, 0.0
        %v1007 = vmax.f32 %v989, 0.0
        %v1008 = vpack.c.bf16 %v993, %v992
        %v1009 = vpack.c.bf16 %v995, %v994
        %v1010 = vpack.c.bf16 %v997, %v996
        %v1011 = vpack.c.bf16 %v999, %v998
        %v1012 = vpack.c.bf16 %v1001, %v1000
        %v1013 = vpack.c.bf16 %v1003, %v1002
        %v1014 = vpack.c.bf16 %v1005, %v1004
        %v1015 = vpack.c.bf16 %v1007, %v1006
        %v1016 = vld [vmem:[#allocation8] sm:$0xf]
        %v1017 = vld [vmem:[#allocation8 + $0x4] sm:$0xf]
        %v1018 = vld [vmem:[#allocation8 + $0x8] sm:$0xf]
        %v1019 = vld [vmem:[#allocation8 + $0xc] sm:$0xf]
        %v1020 = vld [vmem:[#allocation8 + $0x10] sm:$0xf]
        %v1021 = vld [vmem:[#allocation8 + $0x14] sm:$0xf]
        %v1022 = vld [vmem:[#allocation8 + $0x18] sm:$0xf]
        %v1023 = vld [vmem:[#allocation8 + $0x1c] sm:$0xf]
        %v1024 = vld [vmem:[#allocation8 + $0x20] sm:$0xf]
        %v1025 = vld [vmem:[#allocation8 + $0x24] sm:$0xf]
        %v1026 = vld [vmem:[#allocation8 + $0x28] sm:$0xf]
        %v1027 = vld [vmem:[#allocation8 + $0x2c] sm:$0xf]
        %v1028 = vld [vmem:[#allocation8 + $0x30] sm:$0xf]
        %v1029 = vld [vmem:[#allocation8 + $0x34] sm:$0xf]
        %v1030 = vld [vmem:[#allocation8 + $0x38] sm:$0xf]
        %v1031 = vld [vmem:[#allocation8 + $0x3c] sm:$0xf]
        %v1032 = vld [vmem:[%s6] sm:$0x1]
        %v1034 = vlaneseq
        %v1035 = vshrl.u32 %v1034, 7
        %v1036 = vsub.s32 0, %v1035
        %v1037 = vrot.slane %v1032, %v1036
        %v1055 = vunpack.c.l.b16 %v1016
        %v1056 = vunpack.c.l.b16 %v1017
        %v1057 = vunpack.c.l.b16 %v1018
        %v1058 = vunpack.c.l.b16 %v1019
        %v1059 = vunpack.c.l.b16 %v1020
        %v1060 = vunpack.c.l.b16 %v1021
        %v1061 = vunpack.c.l.b16 %v1022
        %v1062 = vunpack.c.l.b16 %v1023
        %v1063 = vunpack.c.l.b16 %v1024
        %v1064 = vunpack.c.l.b16 %v1025
        %v1065 = vunpack.c.l.b16 %v1026
        %v1066 = vunpack.c.l.b16 %v1027
        %v1067 = vunpack.c.l.b16 %v1028
        %v1068 = vunpack.c.l.b16 %v1029
        %v1069 = vunpack.c.l.b16 %v1030
        %v1070 = vunpack.c.l.b16 %v1031
        %v1071 = vpack.c.b16 %v1056, %v1055
        %v1072 = vpack.c.b16 %v1058, %v1057
        %v1073 = vpack.c.b16 %v1060, %v1059
        %v1074 = vpack.c.b16 %v1062, %v1061
        %v1075 = vpack.c.b16 %v1064, %v1063
        %v1076 = vpack.c.b16 %v1066, %v1065
        %v1077 = vpack.c.b16 %v1068, %v1067
        %v1078 = vpack.c.b16 %v1070, %v1069
        %1087 = vmatprep.subr.bf16.mxu0 0
        %1088 = vmatpush1.bf16.msra.mxu0 %v1078
        %1089 = vmatprep.subr.bf16.mxu0 0
        %1090 = vmatpush1.bf16.msra.mxu0 %v1077
        %1091 = vmatprep.subr.bf16.mxu0 0
        %1092 = vmatpush1.bf16.msra.mxu0 %v1076
        %1093 = vmatprep.subr.bf16.mxu0 0
        %1094 = vmatpush1.bf16.msra.mxu0 %v1075
        %1095 = vmatprep.subr.bf16.mxu0 0
        %1096 = vmatpush1.bf16.msra.mxu0 %v1074
        %1097 = vmatprep.subr.bf16.mxu0 0
        %1098 = vmatpush1.bf16.msra.mxu0 %v1073
        %1099 = vmatprep.subr.bf16.mxu0 0
        %1100 = vmatpush1.bf16.msra.mxu0 %v1072
        %1101 = vmatprep.subr.bf16.mxu0 0
        %1102 = vmatpush1.bf16.msra.mxu0 %v1071
        %1103 = vmatprep.subr.bf16.mxu0 0
        %1104 = vmatpush2.bf16.msra.mxu0 0
        %1105 = vmatprep.subr.bf16.mxu0 0
        %1106 = vmatpush2.bf16.msra.mxu0 0
        %1107 = vmatprep.subr.bf16.mxu0 0
        %1108 = vmatpush2.bf16.msra.mxu0 0
        %1109 = vmatprep.subr.bf16.mxu0 0
        %1110 = vmatpush2.bf16.msra.mxu0 0
        %1111 = vmatprep.subr.bf16.mxu0 0
        %1112 = vmatpush2.bf16.msra.mxu0 0
        %1113 = vmatprep.subr.bf16.mxu0 0
        %1114 = vmatpush2.bf16.msra.mxu0 0
        %1115 = vmatprep.subr.bf16.mxu0 0
        %1116 = vmatpush2.bf16.msra.mxu0 0
        %1117 = vmatprep.subr.bf16.mxu0 0
        %1118 = vmatpush2.bf16.msra.mxu0 0
        %1119 = vmatprep.mubr.bf16.mxu0 0
        %1120 = vmatmul.mubr.bf16.gmra.mxu0 %v1008
        %v1121 = vpop.f32.mrf.mxu0
        %v1122 = vadd.f32 %v1037, %v1121
        %v1123 = vpop.f32.mrf.mxu0
        %v1124 = vpop.f32.mrf.mxu0
        %v1125 = vadd.f32 %v1037, %v1124
        %v1126 = vpop.f32.mrf.mxu0
        %1127 = vmatprep.mubr.bf16.mxu0 0
        %1128 = vmatmul.mubr.bf16.gmra.mxu0 %v1009
        %v1129 = vpop.f32.mrf.mxu0
        %v1130 = vadd.f32 %v1037, %v1129
        %v1131 = vpop.f32.mrf.mxu0
        %v1132 = vpop.f32.mrf.mxu0
        %v1133 = vadd.f32 %v1037, %v1132
        %v1134 = vpop.f32.mrf.mxu0
        %1135 = vmatprep.mubr.bf16.mxu0 0
        %1136 = vmatmul.mubr.bf16.gmra.mxu0 %v1010
        %v1137 = vpop.f32.mrf.mxu0
        %v1138 = vadd.f32 %v1037, %v1137
        %v1139 = vpop.f32.mrf.mxu0
        %v1140 = vpop.f32.mrf.mxu0
        %v1141 = vadd.f32 %v1037, %v1140
        %v1142 = vpop.f32.mrf.mxu0
        %1143 = vmatprep.mubr.bf16.mxu0 0
        %1144 = vmatmul.mubr.bf16.gmra.mxu0 %v1011
        %v1145 = vpop.f32.mrf.mxu0
        %v1146 = vadd.f32 %v1037, %v1145
        %v1147 = vpop.f32.mrf.mxu0
        %v1148 = vpop.f32.mrf.mxu0
        %v1149 = vadd.f32 %v1037, %v1148
        %v1150 = vpop.f32.mrf.mxu0
        %1151 = vmatprep.mubr.bf16.mxu0 0
        %1152 = vmatmul.mubr.bf16.gmra.mxu0 %v1012
        %v1153 = vpop.f32.mrf.mxu0
        %v1154 = vadd.f32 %v1037, %v1153
        %v1155 = vpop.f32.mrf.mxu0
        %v1156 = vpop.f32.mrf.mxu0
        %v1157 = vadd.f32 %v1037, %v1156
        %v1158 = vpop.f32.mrf.mxu0
        %1159 = vmatprep.mubr.bf16.mxu0 0
        %1160 = vmatmul.mubr.bf16.gmra.mxu0 %v1013
        %v1161 = vpop.f32.mrf.mxu0
        %v1162 = vadd.f32 %v1037, %v1161
        %v1163 = vpop.f32.mrf.mxu0
        %v1164 = vpop.f32.mrf.mxu0
        %v1165 = vadd.f32 %v1037, %v1164
        %v1166 = vpop.f32.mrf.mxu0
        %1167 = vmatprep.mubr.bf16.mxu0 0
        %1168 = vmatmul.mubr.bf16.gmra.mxu0 %v1014
        %v1169 = vpop.f32.mrf.mxu0
        %v1170 = vadd.f32 %v1037, %v1169
        %v1171 = vpop.f32.mrf.mxu0
        %v1172 = vpop.f32.mrf.mxu0
        %v1173 = vadd.f32 %v1037, %v1172
        %v1174 = vpop.f32.mrf.mxu0
        %1175 = vmatprep.mubr.bf16.mxu0 0
        %1176 = vmatmul.mubr.bf16.gmra.mxu0 %v1015
        %v1177 = vpop.f32.mrf.mxu0
        %v1178 = vadd.f32 %v1037, %v1177
        %v1179 = vpop.f32.mrf.mxu0
        %v1180 = vpop.f32.mrf.mxu0
        %v1181 = vadd.f32 %v1037, %v1180
        %v1182 = vpop.f32.mrf.mxu0
        %1183 = vdwg.mxu0
        %v1184 = vpack.c.bf16 %v1125, %v1122
        %v1185 = vpack.c.bf16 %v1133, %v1130
        %v1186 = vpack.c.bf16 %v1141, %v1138
        %v1187 = vpack.c.bf16 %v1149, %v1146
        %v1188 = vpack.c.bf16 %v1157, %v1154
        %v1189 = vpack.c.bf16 %v1165, %v1162
        %v1190 = vpack.c.bf16 %v1173, %v1170
        %v1191 = vpack.c.bf16 %v1181, %v1178
        %v1192 = vld [vmem:[#allocation10] sm:$0xff]
        %v1193 = vld [vmem:[#allocation10 + $0x8] sm:$0xff]
        %v1194 = vld [vmem:[#allocation10 + $0x10] sm:$0xff]
        %v1195 = vld [vmem:[#allocation10 + $0x18] sm:$0xff]
        %v1196 = vld [vmem:[#allocation10 + $0x20] sm:$0xff]
        %v1197 = vld [vmem:[#allocation10 + $0x28] sm:$0xff]
        %v1198 = vld [vmem:[#allocation10 + $0x30] sm:$0xff]
        %v1199 = vld [vmem:[#allocation10 + $0x38] sm:$0xff]
        %v1200 = vld [vmem:[#allocation10 + $0x40] sm:$0xff]
        %v1201 = vld [vmem:[#allocation10 + $0x48] sm:$0xff]
        %v1202 = vld [vmem:[#allocation10 + $0x50] sm:$0xff]
        %v1203 = vld [vmem:[#allocation10 + $0x58] sm:$0xff]
        %v1204 = vld [vmem:[#allocation10 + $0x60] sm:$0xff]
        %v1205 = vld [vmem:[#allocation10 + $0x68] sm:$0xff]
        %v1206 = vld [vmem:[#allocation10 + $0x70] sm:$0xff]
        %v1207 = vld [vmem:[#allocation10 + $0x78] sm:$0xff]
        %v1208 = vld [vmem:[%s8] sm:$0x3]
        %v1210 = vlaneseq
        %v1211 = vshrl.u32 %v1210, 7
        %v1212 = vsub.s32 0, %v1211
        %v1213 = vrot.slane %v1208, %v1212
        %v1214 = vlaneseq
        %v1215 = vshrl.u32 %v1214, 7
        %v1216 = vsub.s32 1, %v1215
        %v1217 = vrot.slane %v1208, %v1216
        %v1236 = vunpack.c.l.b16 %v1192
        %v1237 = vunpack.c.h.b16 %v1192
        %v1238 = vunpack.c.l.b16 %v1193
        %v1239 = vunpack.c.h.b16 %v1193
        %v1240 = vunpack.c.l.b16 %v1194
        %v1241 = vunpack.c.h.b16 %v1194
        %v1242 = vunpack.c.l.b16 %v1195
        %v1243 = vunpack.c.h.b16 %v1195
        %v1244 = vunpack.c.l.b16 %v1196
        %v1245 = vunpack.c.h.b16 %v1196
        %v1246 = vunpack.c.l.b16 %v1197
        %v1247 = vunpack.c.h.b16 %v1197
        %v1248 = vunpack.c.l.b16 %v1198
        %v1249 = vunpack.c.h.b16 %v1198
        %v1250 = vunpack.c.l.b16 %v1199
        %v1251 = vunpack.c.h.b16 %v1199
        %v1252 = vunpack.c.l.b16 %v1200
        %v1253 = vunpack.c.h.b16 %v1200
        %v1254 = vunpack.c.l.b16 %v1201
        %v1255 = vunpack.c.h.b16 %v1201
        %v1256 = vunpack.c.l.b16 %v1202
        %v1257 = vunpack.c.h.b16 %v1202
        %v1258 = vunpack.c.l.b16 %v1203
        %v1259 = vunpack.c.h.b16 %v1203
        %v1260 = vunpack.c.l.b16 %v1204
        %v1261 = vunpack.c.h.b16 %v1204
        %v1262 = vunpack.c.l.b16 %v1205
        %v1263 = vunpack.c.h.b16 %v1205
        %v1264 = vunpack.c.l.b16 %v1206
        %v1265 = vunpack.c.h.b16 %v1206
        %v1266 = vunpack.c.l.b16 %v1207
        %v1267 = vunpack.c.h.b16 %v1207
        %v1268 = vpack.c.b16 %v1238, %v1236
        %v1269 = vpack.c.b16 %v1239, %v1237
        %v1270 = vpack.c.b16 %v1242, %v1240
        %v1271 = vpack.c.b16 %v1243, %v1241
        %v1272 = vpack.c.b16 %v1246, %v1244
        %v1273 = vpack.c.b16 %v1247, %v1245
        %v1274 = vpack.c.b16 %v1250, %v1248
        %v1275 = vpack.c.b16 %v1251, %v1249
        %v1276 = vpack.c.b16 %v1254, %v1252
        %v1277 = vpack.c.b16 %v1255, %v1253
        %v1278 = vpack.c.b16 %v1258, %v1256
        %v1279 = vpack.c.b16 %v1259, %v1257
        %v1280 = vpack.c.b16 %v1262, %v1260
        %v1281 = vpack.c.b16 %v1263, %v1261
        %v1282 = vpack.c.b16 %v1266, %v1264
        %v1283 = vpack.c.b16 %v1267, %v1265
        %1300 = vmatprep.subr.bf16.mxu0 %v1283
        %1301 = vmatpush1.bf16.msra.mxu0 %v1282
        %1302 = vmatprep.subr.bf16.mxu0 %v1281
        %1303 = vmatpush1.bf16.msra.mxu0 %v1280
        %1304 = vmatprep.subr.bf16.mxu0 %v1279
        %1305 = vmatpush1.bf16.msra.mxu0 %v1278
        %1306 = vmatprep.subr.bf16.mxu0 %v1277
        %1307 = vmatpush1.bf16.msra.mxu0 %v1276
        %1308 = vmatprep.subr.bf16.mxu0 %v1275
        %1309 = vmatpush1.bf16.msra.mxu0 %v1274
        %1310 = vmatprep.subr.bf16.mxu0 %v1273
        %1311 = vmatpush1.bf16.msra.mxu0 %v1272
        %1312 = vmatprep.subr.bf16.mxu0 %v1271
        %1313 = vmatpush1.bf16.msra.mxu0 %v1270
        %1314 = vmatprep.subr.bf16.mxu0 %v1269
        %1315 = vmatpush1.bf16.msra.mxu0 %v1268
        %1316 = vmatprep.subr.bf16.mxu0 0
        %1317 = vmatpush2.bf16.msra.mxu0 0
        %1318 = vmatprep.subr.bf16.mxu0 0
        %1319 = vmatpush2.bf16.msra.mxu0 0
        %1320 = vmatprep.subr.bf16.mxu0 0
        %1321 = vmatpush2.bf16.msra.mxu0 0
        %1322 = vmatprep.subr.bf16.mxu0 0
        %1323 = vmatpush2.bf16.msra.mxu0 0
        %1324 = vmatprep.subr.bf16.mxu0 0
        %1325 = vmatpush2.bf16.msra.mxu0 0
        %1326 = vmatprep.subr.bf16.mxu0 0
        %1327 = vmatpush2.bf16.msra.mxu0 0
        %1328 = vmatprep.subr.bf16.mxu0 0
        %1329 = vmatpush2.bf16.msra.mxu0 0
        %1330 = vmatprep.subr.bf16.mxu0 0
        %1331 = vmatpush2.bf16.msra.mxu0 0
        %1332 = vmatprep.mubr.bf16.mxu0 0
        %1333 = vmatmul.mubr.bf16.gmra.mxu0 %v1184
        %v1334 = vpop.f32.mrf.mxu0
        %v1335 = vadd.f32 %v1213, %v1334
        %v1336 = vpop.f32.mrf.mxu0
        %v1337 = vadd.f32 %v1217, %v1336
        %v1338 = vpop.f32.mrf.mxu0
        %v1339 = vadd.f32 %v1213, %v1338
        %v1340 = vpop.f32.mrf.mxu0
        %v1341 = vadd.f32 %v1217, %v1340
        %1342 = vmatprep.mubr.bf16.mxu0 0
        %1343 = vmatmul.mubr.bf16.gmra.mxu0 %v1185
        %v1344 = vpop.f32.mrf.mxu0
        %v1345 = vadd.f32 %v1213, %v1344
        %v1346 = vpop.f32.mrf.mxu0
        %v1347 = vadd.f32 %v1217, %v1346
        %v1348 = vpop.f32.mrf.mxu0
        %v1349 = vadd.f32 %v1213, %v1348
        %v1350 = vpop.f32.mrf.mxu0
        %v1351 = vadd.f32 %v1217, %v1350
        %1352 = vmatprep.mubr.bf16.mxu0 0
        %1353 = vmatmul.mubr.bf16.gmra.mxu0 %v1186
        %v1354 = vpop.f32.mrf.mxu0
        %v1355 = vadd.f32 %v1213, %v1354
        %v1356 = vpop.f32.mrf.mxu0
        %v1357 = vadd.f32 %v1217, %v1356
        %v1358 = vpop.f32.mrf.mxu0
        %v1359 = vadd.f32 %v1213, %v1358
        %v1360 = vpop.f32.mrf.mxu0
        %v1361 = vadd.f32 %v1217, %v1360
        %1362 = vmatprep.mubr.bf16.mxu0 0
        %1363 = vmatmul.mubr.bf16.gmra.mxu0 %v1187
        %v1364 = vpop.f32.mrf.mxu0
        %v1365 = vadd.f32 %v1213, %v1364
        %v1366 = vpop.f32.mrf.mxu0
        %v1367 = vadd.f32 %v1217, %v1366
        %v1368 = vpop.f32.mrf.mxu0
        %v1369 = vadd.f32 %v1213, %v1368
        %v1370 = vpop.f32.mrf.mxu0
        %v1371 = vadd.f32 %v1217, %v1370
        %1372 = vmatprep.mubr.bf16.mxu0 0
        %1373 = vmatmul.mubr.bf16.gmra.mxu0 %v1188
        %v1374 = vpop.f32.mrf.mxu0
        %v1375 = vadd.f32 %v1213, %v1374
        %v1376 = vpop.f32.mrf.mxu0
        %v1377 = vadd.f32 %v1217, %v1376
        %v1378 = vpop.f32.mrf.mxu0
        %v1379 = vadd.f32 %v1213, %v1378
        %v1380 = vpop.f32.mrf.mxu0
        %v1381 = vadd.f32 %v1217, %v1380
        %1382 = vmatprep.mubr.bf16.mxu0 0
        %1383 = vmatmul.mubr.bf16.gmra.mxu0 %v1189
        %v1384 = vpop.f32.mrf.mxu0
        %v1385 = vadd.f32 %v1213, %v1384
        %v1386 = vpop.f32.mrf.mxu0
        %v1387 = vadd.f32 %v1217, %v1386
        %v1388 = vpop.f32.mrf.mxu0
        %v1389 = vadd.f32 %v1213, %v1388
        %v1390 = vpop.f32.mrf.mxu0
        %v1391 = vadd.f32 %v1217, %v1390
        %1392 = vmatprep.mubr.bf16.mxu0 0
        %1393 = vmatmul.mubr.bf16.gmra.mxu0 %v1190
        %v1394 = vpop.f32.mrf.mxu0
        %v1395 = vadd.f32 %v1213, %v1394
        %v1396 = vpop.f32.mrf.mxu0
        %v1397 = vadd.f32 %v1217, %v1396
        %v1398 = vpop.f32.mrf.mxu0
        %v1399 = vadd.f32 %v1213, %v1398
        %v1400 = vpop.f32.mrf.mxu0
        %v1401 = vadd.f32 %v1217, %v1400
        %1402 = vmatprep.mubr.bf16.mxu0 0
        %1403 = vmatmul.mubr.bf16.gmra.mxu0 %v1191
        %v1404 = vpop.f32.mrf.mxu0
        %v1405 = vadd.f32 %v1213, %v1404
        %v1406 = vpop.f32.mrf.mxu0
        %v1407 = vadd.f32 %v1217, %v1406
        %v1408 = vpop.f32.mrf.mxu0
        %v1409 = vadd.f32 %v1213, %v1408
        %v1410 = vpop.f32.mrf.mxu0
        %v1411 = vadd.f32 %v1217, %v1410
        %1412 = vdwg.mxu0
        %v1413 = vmax.f32 %v1335, 0.0
        %v1414 = vmax.f32 %v1337, 0.0
        %v1415 = vmax.f32 %v1339, 0.0
        %v1416 = vmax.f32 %v1341, 0.0
        %v1417 = vmax.f32 %v1345, 0.0
        %v1418 = vmax.f32 %v1347, 0.0
        %v1419 = vmax.f32 %v1349, 0.0
        %v1420 = vmax.f32 %v1351, 0.0
        %v1421 = vmax.f32 %v1355, 0.0
        %v1422 = vmax.f32 %v1357, 0.0
        %v1423 = vmax.f32 %v1359, 0.0
        %v1424 = vmax.f32 %v1361, 0.0
        %v1425 = vmax.f32 %v1365, 0.0
        %v1426 = vmax.f32 %v1367, 0.0
        %v1427 = vmax.f32 %v1369, 0.0
        %v1428 = vmax.f32 %v1371, 0.0
        %v1429 = vmax.f32 %v1375, 0.0
        %v1430 = vmax.f32 %v1377, 0.0
        %v1431 = vmax.f32 %v1379, 0.0
        %v1432 = vmax.f32 %v1381, 0.0
        %v1433 = vmax.f32 %v1385, 0.0
        %v1434 = vmax.f32 %v1387, 0.0
        %v1435 = vmax.f32 %v1389, 0.0
        %v1436 = vmax.f32 %v1391, 0.0
        %v1437 = vmax.f32 %v1395, 0.0
        %v1438 = vmax.f32 %v1397, 0.0
        %v1439 = vmax.f32 %v1399, 0.0
        %v1440 = vmax.f32 %v1401, 0.0
        %v1441 = vmax.f32 %v1405, 0.0
        %v1442 = vmax.f32 %v1407, 0.0
        %v1443 = vmax.f32 %v1409, 0.0
        %v1444 = vmax.f32 %v1411, 0.0
        %v1445 = vpack.c.bf16 %v1415, %v1413
        %v1446 = vpack.c.bf16 %v1416, %v1414
        %v1447 = vpack.c.bf16 %v1419, %v1417
        %v1448 = vpack.c.bf16 %v1420, %v1418
        %v1449 = vpack.c.bf16 %v1423, %v1421
        %v1450 = vpack.c.bf16 %v1424, %v1422
        %v1451 = vpack.c.bf16 %v1427, %v1425
        %v1452 = vpack.c.bf16 %v1428, %v1426
        %v1453 = vpack.c.bf16 %v1431, %v1429
        %v1454 = vpack.c.bf16 %v1432, %v1430
        %v1455 = vpack.c.bf16 %v1435, %v1433
        %v1456 = vpack.c.bf16 %v1436, %v1434
        %v1457 = vpack.c.bf16 %v1439, %v1437
        %v1458 = vpack.c.bf16 %v1440, %v1438
        %v1459 = vpack.c.bf16 %v1443, %v1441
        %v1460 = vpack.c.bf16 %v1444, %v1442
        %v1461 = vld [vmem:[#allocation11] sm:$0xf]
        %v1462 = vld [vmem:[#allocation11 + $0x4] sm:$0xf]
        %v1463 = vld [vmem:[#allocation11 + $0x8] sm:$0xf]
        %v1464 = vld [vmem:[#allocation11 + $0xc] sm:$0xf]
        %v1465 = vld [vmem:[#allocation11 + $0x10] sm:$0xf]
        %v1466 = vld [vmem:[#allocation11 + $0x14] sm:$0xf]
        %v1467 = vld [vmem:[#allocation11 + $0x18] sm:$0xf]
        %v1468 = vld [vmem:[#allocation11 + $0x1c] sm:$0xf]
        %v1469 = vld [vmem:[#allocation11 + $0x20] sm:$0xf]
        %v1470 = vld [vmem:[#allocation11 + $0x24] sm:$0xf]
        %v1471 = vld [vmem:[#allocation11 + $0x28] sm:$0xf]
        %v1472 = vld [vmem:[#allocation11 + $0x2c] sm:$0xf]
        %v1473 = vld [vmem:[#allocation11 + $0x30] sm:$0xf]
        %v1474 = vld [vmem:[#allocation11 + $0x34] sm:$0xf]
        %v1475 = vld [vmem:[#allocation11 + $0x38] sm:$0xf]
        %v1476 = vld [vmem:[#allocation11 + $0x3c] sm:$0xf]
        %v1477 = vld [vmem:[#allocation11 + $0x40] sm:$0xf]
        %v1478 = vld [vmem:[#allocation11 + $0x44] sm:$0xf]
        %v1479 = vld [vmem:[#allocation11 + $0x48] sm:$0xf]
        %v1480 = vld [vmem:[#allocation11 + $0x4c] sm:$0xf]
        %v1481 = vld [vmem:[#allocation11 + $0x50] sm:$0xf]
        %v1482 = vld [vmem:[#allocation11 + $0x54] sm:$0xf]
        %v1483 = vld [vmem:[#allocation11 + $0x58] sm:$0xf]
        %v1484 = vld [vmem:[#allocation11 + $0x5c] sm:$0xf]
        %v1485 = vld [vmem:[#allocation11 + $0x60] sm:$0xf]
        %v1486 = vld [vmem:[#allocation11 + $0x64] sm:$0xf]
        %v1487 = vld [vmem:[#allocation11 + $0x68] sm:$0xf]
        %v1488 = vld [vmem:[#allocation11 + $0x6c] sm:$0xf]
        %v1489 = vld [vmem:[#allocation11 + $0x70] sm:$0xf]
        %v1490 = vld [vmem:[#allocation11 + $0x74] sm:$0xf]
        %v1491 = vld [vmem:[#allocation11 + $0x78] sm:$0xf]
        %v1492 = vld [vmem:[#allocation11 + $0x7c] sm:$0xf]
        %v1493 = vld [vmem:[%s10] sm:$0x1]
        %v1495 = vlaneseq
        %v1496 = vshrl.u32 %v1495, 7
        %v1497 = vsub.s32 0, %v1496
        %v1498 = vrot.slane %v1493, %v1497
        %v1532 = vunpack.c.l.b16 %v1461
        %v1533 = vunpack.c.l.b16 %v1462
        %v1534 = vunpack.c.l.b16 %v1463
        %v1535 = vunpack.c.l.b16 %v1464
        %v1536 = vunpack.c.l.b16 %v1465
        %v1537 = vunpack.c.l.b16 %v1466
        %v1538 = vunpack.c.l.b16 %v1467
        %v1539 = vunpack.c.l.b16 %v1468
        %v1540 = vunpack.c.l.b16 %v1469
        %v1541 = vunpack.c.l.b16 %v1470
        %v1542 = vunpack.c.l.b16 %v1471
        %v1543 = vunpack.c.l.b16 %v1472
        %v1544 = vunpack.c.l.b16 %v1473
        %v1545 = vunpack.c.l.b16 %v1474
        %v1546 = vunpack.c.l.b16 %v1475
        %v1547 = vunpack.c.l.b16 %v1476
        %v1548 = vunpack.c.l.b16 %v1477
        %v1549 = vunpack.c.l.b16 %v1478
        %v1550 = vunpack.c.l.b16 %v1479
        %v1551 = vunpack.c.l.b16 %v1480
        %v1552 = vunpack.c.l.b16 %v1481
        %v1553 = vunpack.c.l.b16 %v1482
        %v1554 = vunpack.c.l.b16 %v1483
        %v1555 = vunpack.c.l.b16 %v1484
        %v1556 = vunpack.c.l.b16 %v1485
        %v1557 = vunpack.c.l.b16 %v1486
        %v1558 = vunpack.c.l.b16 %v1487
        %v1559 = vunpack.c.l.b16 %v1488
        %v1560 = vunpack.c.l.b16 %v1489
        %v1561 = vunpack.c.l.b16 %v1490
        %v1562 = vunpack.c.l.b16 %v1491
        %v1563 = vunpack.c.l.b16 %v1492
        %v1564 = vpack.c.b16 %v1533, %v1532
        %v1565 = vpack.c.b16 %v1535, %v1534
        %v1566 = vpack.c.b16 %v1537, %v1536
        %v1567 = vpack.c.b16 %v1539, %v1538
        %v1568 = vpack.c.b16 %v1541, %v1540
        %v1569 = vpack.c.b16 %v1543, %v1542
        %v1570 = vpack.c.b16 %v1545, %v1544
        %v1571 = vpack.c.b16 %v1547, %v1546
        %v1572 = vpack.c.b16 %v1549, %v1548
        %v1573 = vpack.c.b16 %v1551, %v1550
        %v1574 = vpack.c.b16 %v1553, %v1552
        %v1575 = vpack.c.b16 %v1555, %v1554
        %v1576 = vpack.c.b16 %v1557, %v1556
        %v1577 = vpack.c.b16 %v1559, %v1558
        %v1578 = vpack.c.b16 %v1561, %v1560
        %v1579 = vpack.c.b16 %v1563, %v1562
        %1596 = vmatprep.subr.bf16.mxu0 0
        %1597 = vmatpush1.bf16.msra.mxu0 %v1571
        %1598 = vmatprep.subr.bf16.mxu0 0
        %1599 = vmatpush1.bf16.msra.mxu0 %v1570
        %1600 = vmatprep.subr.bf16.mxu0 0
        %1601 = vmatpush1.bf16.msra.mxu0 %v1569
        %1602 = vmatprep.subr.bf16.mxu0 0
        %1603 = vmatpush1.bf16.msra.mxu0 %v1568
        %1604 = vmatprep.subr.bf16.mxu0 0
        %1605 = vmatpush1.bf16.msra.mxu0 %v1567
        %1606 = vmatprep.subr.bf16.mxu0 0
        %1607 = vmatpush1.bf16.msra.mxu0 %v1566
        %1608 = vmatprep.subr.bf16.mxu0 0
        %1609 = vmatpush1.bf16.msra.mxu0 %v1565
        %1610 = vmatprep.subr.bf16.mxu0 0
        %1611 = vmatpush1.bf16.msra.mxu0 %v1564
        %1612 = vmatprep.subr.bf16.mxu0 0
        %1613 = vmatpush2.bf16.msra.mxu0 %v1579
        %1614 = vmatprep.subr.bf16.mxu0 0
        %1615 = vmatpush2.bf16.msra.mxu0 %v1578
        %1616 = vmatprep.subr.bf16.mxu0 0
        %1617 = vmatpush2.bf16.msra.mxu0 %v1577
        %1618 = vmatprep.subr.bf16.mxu0 0
        %1619 = vmatpush2.bf16.msra.mxu0 %v1576
        %1620 = vmatprep.subr.bf16.mxu0 0
        %1621 = vmatpush2.bf16.msra.mxu0 %v1575
        %1622 = vmatprep.subr.bf16.mxu0 0
        %1623 = vmatpush2.bf16.msra.mxu0 %v1574
        %1624 = vmatprep.subr.bf16.mxu0 0
        %1625 = vmatpush2.bf16.msra.mxu0 %v1573
        %1626 = vmatprep.subr.bf16.mxu0 0
        %1627 = vmatpush2.bf16.msra.mxu0 %v1572
        %1628 = vmatprep.mubr.bf16.mxu0 %v1446
        %1629 = vmatmul.mubr.bf16.gmra.mxu0 %v1445
        %v1630 = vpop.f32.mrf.mxu0
        %v1631 = vadd.f32 %v1498, %v1630
        %v1632 = vpop.f32.mrf.mxu0
        %v1633 = vpop.f32.mrf.mxu0
        %v1634 = vadd.f32 %v1498, %v1633
        %v1635 = vpop.f32.mrf.mxu0
        %1636 = vmatprep.mubr.bf16.mxu0 %v1448
        %1637 = vmatmul.mubr.bf16.gmra.mxu0 %v1447
        %v1638 = vpop.f32.mrf.mxu0
        %v1639 = vadd.f32 %v1498, %v1638
        %v1640 = vpop.f32.mrf.mxu0
        %v1641 = vpop.f32.mrf.mxu0
        %v1642 = vadd.f32 %v1498, %v1641
        %v1643 = vpop.f32.mrf.mxu0
        %1644 = vmatprep.mubr.bf16.mxu0 %v1450
        %1645 = vmatmul.mubr.bf16.gmra.mxu0 %v1449
        %v1646 = vpop.f32.mrf.mxu0
        %v1647 = vadd.f32 %v1498, %v1646
        %v1648 = vpop.f32.mrf.mxu0
        %v1649 = vpop.f32.mrf.mxu0
        %v1650 = vadd.f32 %v1498, %v1649
        %v1651 = vpop.f32.mrf.mxu0
        %1652 = vmatprep.mubr.bf16.mxu0 %v1452
        %1653 = vmatmul.mubr.bf16.gmra.mxu0 %v1451
        %v1654 = vpop.f32.mrf.mxu0
        %v1655 = vadd.f32 %v1498, %v1654
        %v1656 = vpop.f32.mrf.mxu0
        %v1657 = vpop.f32.mrf.mxu0
        %v1658 = vadd.f32 %v1498, %v1657
        %v1659 = vpop.f32.mrf.mxu0
        %1660 = vmatprep.mubr.bf16.mxu0 %v1454
        %1661 = vmatmul.mubr.bf16.gmra.mxu0 %v1453
        %v1662 = vpop.f32.mrf.mxu0
        %v1663 = vadd.f32 %v1498, %v1662
        %v1664 = vpop.f32.mrf.mxu0
        %v1665 = vpop.f32.mrf.mxu0
        %v1666 = vadd.f32 %v1498, %v1665
        %v1667 = vpop.f32.mrf.mxu0
        %1668 = vmatprep.mubr.bf16.mxu0 %v1456
        %1669 = vmatmul.mubr.bf16.gmra.mxu0 %v1455
        %v1670 = vpop.f32.mrf.mxu0
        %v1671 = vadd.f32 %v1498, %v1670
        %v1672 = vpop.f32.mrf.mxu0
        %v1673 = vpop.f32.mrf.mxu0
        %v1674 = vadd.f32 %v1498, %v1673
        %v1675 = vpop.f32.mrf.mxu0
        %1676 = vmatprep.mubr.bf16.mxu0 %v1458
        %1677 = vmatmul.mubr.bf16.gmra.mxu0 %v1457
        %v1678 = vpop.f32.mrf.mxu0
        %v1679 = vadd.f32 %v1498, %v1678
        %v1680 = vpop.f32.mrf.mxu0
        %v1681 = vpop.f32.mrf.mxu0
        %v1682 = vadd.f32 %v1498, %v1681
        %v1683 = vpop.f32.mrf.mxu0
        %1684 = vmatprep.mubr.bf16.mxu0 %v1460
        %1685 = vmatmul.mubr.bf16.gmra.mxu0 %v1459
        %v1686 = vpop.f32.mrf.mxu0
        %v1687 = vadd.f32 %v1498, %v1686
        %v1688 = vpop.f32.mrf.mxu0
        %v1689 = vpop.f32.mrf.mxu0
        %v1690 = vadd.f32 %v1498, %v1689
        %v1691 = vpop.f32.mrf.mxu0
        %1692 = vdwg.mxu0
        %1693 = vst [vmem:[%s509] sm:$0xff] %v1631
        %1694 = vst [vmem:[%s509 + $0x8] sm:$0xff] %v1634
        %1695 = vst [vmem:[%s509 + $0x10] sm:$0xff] %v1639
        %1696 = vst [vmem:[%s509 + $0x18] sm:$0xff] %v1642
        %1697 = vst [vmem:[%s509 + $0x20] sm:$0xff] %v1647
        %1698 = vst [vmem:[%s509 + $0x28] sm:$0xff] %v1650
        %1699 = vst [vmem:[%s509 + $0x30] sm:$0xff] %v1655
        %1700 = vst [vmem:[%s509 + $0x38] sm:$0xff] %v1658
        %1701 = vst [vmem:[%s509 + $0x40] sm:$0xff] %v1663
        %1702 = vst [vmem:[%s509 + $0x48] sm:$0xff] %v1666
        %1703 = vst [vmem:[%s509 + $0x50] sm:$0xff] %v1671
        %1704 = vst [vmem:[%s509 + $0x58] sm:$0xff] %v1674
        %1705 = vst [vmem:[%s509 + $0x60] sm:$0xff] %v1679
        %1706 = vst [vmem:[%s509 + $0x68] sm:$0xff] %v1682
        %1707 = vst [vmem:[%s509 + $0x70] sm:$0xff] %v1687
        %1708 = vst [vmem:[%s509 + $0x78] sm:$0xff] %v1690
        %s1709 = smul.u32 %s36, 128
        %v1710 = vlaneseq
        %v1711 = vshrl.u32 %v1710, 7
        %v1712 = vadd.s32 %v1711, 8
        %v1713 = vadd.s32 %v1711, 16
        %v1714 = vadd.s32 %v1711, 24
        %v1715 = vadd.s32 %v1711, 32
        %v1716 = vadd.s32 %v1711, 40
        %v1717 = vadd.s32 %v1711, 48
        %v1718 = vadd.s32 %v1711, 56
        %v1719 = vadd.s32 %v1711, 64
        %v1720 = vadd.s32 %v1711, 72
        %v1721 = vadd.s32 %v1711, 80
        %v1722 = vadd.s32 %v1711, 88
        %v1723 = vadd.s32 %v1711, 96
        %v1724 = vadd.s32 %v1711, 104
        %v1725 = vadd.s32 %v1711, 112
        %v1726 = vadd.s32 %v1711, 120
        %v1727 = vstv %s1709
        %v1728 = vadd.s32 %v1727, %v1711
        %v1729 = vadd.s32 %v1727, %v1712
        %v1730 = vadd.s32 %v1727, %v1713
        %v1731 = vadd.s32 %v1727, %v1714
        %v1732 = vadd.s32 %v1727, %v1715
        %v1733 = vadd.s32 %v1727, %v1716
        %v1734 = vadd.s32 %v1727, %v1717
        %v1735 = vadd.s32 %v1727, %v1718
        %v1736 = vadd.s32 %v1727, %v1719
        %v1737 = vadd.s32 %v1727, %v1720
        %v1738 = vadd.s32 %v1727, %v1721
        %v1739 = vadd.s32 %v1727, %v1722
        %v1740 = vadd.s32 %v1727, %v1723
        %v1741 = vadd.s32 %v1727, %v1724
        %v1742 = vadd.s32 %v1727, %v1725
        %v1743 = vadd.s32 %v1727, %v1726
        %vm1744 = vcmp.lt.s32.totalorder %v1728, 200
        %vm1745 = vcmp.lt.s32.totalorder %v1729, 200
        %vm1746 = vcmp.lt.s32.totalorder %v1730, 200
        %vm1747 = vcmp.lt.s32.totalorder %v1731, 200
        %vm1748 = vcmp.lt.s32.totalorder %v1732, 200
        %vm1749 = vcmp.lt.s32.totalorder %v1733, 200
        %vm1750 = vcmp.lt.s32.totalorder %v1734, 200
        %vm1751 = vcmp.lt.s32.totalorder %v1735, 200
        %vm1752 = vcmp.lt.s32.totalorder %v1736, 200
        %vm1753 = vcmp.lt.s32.totalorder %v1737, 200
        %vm1754 = vcmp.lt.s32.totalorder %v1738, 200
        %vm1755 = vcmp.lt.s32.totalorder %v1739, 200
        %vm1756 = vcmp.lt.s32.totalorder %v1740, 200
        %vm1757 = vcmp.lt.s32.totalorder %v1741, 200
        %vm1758 = vcmp.lt.s32.totalorder %v1742, 200
        %vm1759 = vcmp.lt.s32.totalorder %v1743, 200
        %v1760 = vsel %vm1744, %v1631, 0.0
        %v1761 = vsel %vm1745, %v1634, 0.0
        %v1762 = vsel %vm1746, %v1639, 0.0
        %v1763 = vsel %vm1747, %v1642, 0.0
        %v1764 = vsel %vm1748, %v1647, 0.0
        %v1765 = vsel %vm1749, %v1650, 0.0
        %v1766 = vsel %vm1750, %v1655, 0.0
        %v1767 = vsel %vm1751, %v1658, 0.0
        %v1768 = vsel %vm1752, %v1663, 0.0
        %v1769 = vsel %vm1753, %v1666, 0.0
        %v1770 = vsel %vm1754, %v1671, 0.0
        %v1771 = vsel %vm1755, %v1674, 0.0
        %v1772 = vsel %vm1756, %v1679, 0.0
        %v1773 = vsel %vm1757, %v1682, 0.0
        %v1774 = vsel %vm1758, %v1687, 0.0
        %v1775 = vsel %vm1759, %v1690, 0.0
        %v1776 = vadd.f32 %v1760, %v1761
        %v1777 = vadd.f32 %v1776, %v1762
        %v1778 = vadd.f32 %v1777, %v1763
        %v1779 = vadd.f32 %v1778, %v1764
        %v1780 = vadd.f32 %v1779, %v1765
        %v1781 = vadd.f32 %v1780, %v1766
        %v1782 = vadd.f32 %v1781, %v1767
        %v1783 = vadd.f32 %v1782, %v1768
        %v1784 = vadd.f32 %v1783, %v1769
        %v1785 = vadd.f32 %v1784, %v1770
        %v1786 = vadd.f32 %v1785, %v1771
        %v1787 = vadd.f32 %v1786, %v1772
        %v1788 = vadd.f32 %v1787, %v1773
        %v1789 = vadd.f32 %v1788, %v1774
        %v1790 = vadd.f32 %v1789, %v1775
        %v1791 = vrot.slane %v1790, 4
        %v1792 = vadd.f32 %v1790, %v1791
        %v1793 = vrot.slane %v1792, 2
        %v1794 = vadd.f32 %v1792, %v1793
        %v1795 = vrot.slane %v1794, 1
        %v1796 = vadd.f32 %v1794, %v1795
        %v1797 = vmul.f32 %v1760, %v1760
        %v1798 = vmul.f32 %v1761, %v1761
        %v1799 = vmul.f32 %v1762, %v1762
        %v1800 = vmul.f32 %v1763, %v1763
        %v1801 = vmul.f32 %v1764, %v1764
        %v1802 = vmul.f32 %v1765, %v1765
        %v1803 = vmul.f32 %v1766, %v1766
        %v1804 = vmul.f32 %v1767, %v1767
        %v1805 = vmul.f32 %v1768, %v1768
        %v1806 = vmul.f32 %v1769, %v1769
        %v1807 = vmul.f32 %v1770, %v1770
        %v1808 = vmul.f32 %v1771, %v1771
        %v1809 = vmul.f32 %v1772, %v1772
        %v1810 = vmul.f32 %v1773, %v1773
        %v1811 = vmul.f32 %v1774, %v1774
        %v1812 = vmul.f32 %v1775, %v1775
        %v1813 = vadd.f32 %v1797, %v1798
        %v1814 = vadd.f32 %v1813, %v1799
        %v1815 = vadd.f32 %v1814, %v1800
        %v1816 = vadd.f32 %v1815, %v1801
        %v1817 = vadd.f32 %v1816, %v1802
        %v1818 = vadd.f32 %v1817, %v1803
        %v1819 = vadd.f32 %v1818, %v1804
        %v1820 = vadd.f32 %v1819, %v1805
        %v1821 = vadd.f32 %v1820, %v1806
        %v1822 = vadd.f32 %v1821, %v1807
        %v1823 = vadd.f32 %v1822, %v1808
        %v1824 = vadd.f32 %v1823, %v1809
        %v1825 = vadd.f32 %v1824, %v1810
        %v1826 = vadd.f32 %v1825, %v1811
        %v1827 = vadd.f32 %v1826, %v1812
        %v1828 = vrot.slane %v1827, 4
        %v1829 = vadd.f32 %v1827, %v1828
        %v1830 = vrot.slane %v1829, 2
        %v1831 = vadd.f32 %v1829, %v1830
        %v1832 = vrot.slane %v1831, 1
        %v1833 = vadd.f32 %v1831, %v1832
        %vm1834 = vcmask 1040384
        %v1835 = vsel %vm1834, %v1796, %v1833
        %vm1836 = vcmask 1041408
        %v1837 = vsel %vm1836, %v1835, 0.0
        %1838 = vst [vmem:[%s516] sm:$0xff] %v1837
        %s1839 = sand.u32 %s280, 1
        %s1840 = scalar_lea.sflag [#allocation4], %s1839
        %s1841 = sand.u32 %s280, 1
        %s1842 = smul.addr %s1841, 128
        %s1843 = scalar_lea.vmem [#allocation13], %s1842
        %s1844 = sand.u32 %s306, 1
        %s1845 = scalar_lea.sflag [#allocation15], %s1844
        %s1846 = sand.u32 %s306, 1
        %s1847 = smul.addr %s1846, 8
        %s1848 = scalar_lea.vmem [#allocation14], %s1847
        // Predicated region
        $region89: #{tpu_custom_call.1} parent=63 // pred_check
          %p1849 = pneg %p290
        $region90: #{tpu_custom_call.1} parent=63 // pred_check_branch
          %1851 = sbr.rel (%p1849) target = $region92
        $region91: #{tpu_custom_call.1} parent=63 // pred_region
          %s1852 = smul.u32 16, %s36
          %s1854 = ssub.s32 2048, 2048
          %1855 = vsyncadd %s1840, %s1854
          %s1856 = smul.addr %s1852, 128
          %s1857 = scalar_lea.hbm %s11, %s1856
          %s1858 = sshll.u32 %s1843, 4
          %s1859 = int_to_ptr.vmem [resolvable:$true] %s1858
          %1864 = dma.vmem_to_hbm [thread:$0]  %s1859, 2048, %s1857, %s1840, 128, 128, 8
        $region92: #{tpu_custom_call.1} parent=63 // pred_fallthru
          _
        // Predicated region
        $region93: #{tpu_custom_call.1} parent=63 // pred_check
          %p1865 = pneg %p316
        $region94: #{tpu_custom_call.1} parent=63 // pred_check_branch
          %1867 = sbr.rel (%p1865) target = $region96
        $region95: #{tpu_custom_call.1} parent=63 // pred_region
          %s1869 = ssub.s32 128, 128
          %1870 = vsyncadd %s1845, %s1869
          %s1871 = smul.addr %s36, 128
          %s1872 = scalar_lea.hbm %s12, %s1871
          %s1874 = sshll.u32 %s1848, 4
          %s1875 = int_to_ptr.vmem [resolvable:$true] %s1874
          %1877 = dma.vmem_to_hbm [thread:$0]  %s1875, 128, %s1872, %s1845
        $region96: #{tpu_custom_call.1} parent=63 // pred_fallthru
          _
      $region64: #{tpu_custom_call.1} parent=5 // pred_fallthru
        _
      %p1878 = scmp.le.s32.totalorder 2, %s31
      // Predicated region
      $region97: #{tpu_custom_call.1} parent=5 // pred_check
        %p1879 = pneg %p1878
      $region98: #{tpu_custom_call.1} parent=5 // pred_check_branch
        %1881 = sbr.rel (%p1879) target = $region100
      $region99: #{tpu_custom_call.1} parent=5 // pred_region
        %s1882 = ssub.s32 %s31, 2
        // Predicated region
        $region101: #{tpu_custom_call.1} parent=99 // pred_check
          %p1883 = pneg %p296
        $region102: #{tpu_custom_call.1} parent=99 // pred_check_branch
          %1885 = sbr.rel (%p1883) target = $region104
        $region103: #{tpu_custom_call.1} parent=99 // pred_region
          %s1886 = sand.u32 %s281, 1
          %s1887 = scalar_lea.sflag [#allocation4], %s1886
          %s1888 = sand.u32 %s281, 1
          %s1889 = smul.addr %s1888, 128
          %s1890 = scalar_lea.vmem [#allocation13], %s1889
          %1891 = dma.done %s1887, 2048
        $region104: #{tpu_custom_call.1} parent=99 // pred_fallthru
          _
        // Predicated region
        $region105: #{tpu_custom_call.1} parent=99 // pred_check
          %p1892 = pneg %p322
        $region106: #{tpu_custom_call.1} parent=99 // pred_check_branch
          %1894 = sbr.rel (%p1892) target = $region108
        $region107: #{tpu_custom_call.1} parent=99 // pred_region
          %s1895 = sand.u32 %s307, 1
          %s1896 = scalar_lea.sflag [#allocation15], %s1895
          %s1897 = sand.u32 %s307, 1
          %s1898 = smul.addr %s1897, 8
          %s1899 = scalar_lea.vmem [#allocation14], %s1898
          %1900 = dma.done %s1896, 128
        $region108: #{tpu_custom_call.1} parent=99 // pred_fallthru
          _
      $region100: #{tpu_custom_call.1} parent=5 // pred_fallthru
        _
    $region6: #{tpu_custom_call.1} parent=1 // loop_footer
      %s35 = sadd.s32 1, %s31
    $region7: #{tpu_custom_call.1} parent=1 // loop_footer_branch
      %30 = sbr.rel target = $region3
    $region8: #{tpu_custom_call.1} parent=1 // loop_exit
      _
    %1901 = vsyncpa [#allocation3], 1
    %s1902 = scalar_lea.sflag [#allocation3], 1
    %1903 = vsyncpa %s1902, 1
    %1904 = vsyncpa [#allocation6], 1
    %1905 = vsyncpa [#allocation9], 1
    %1906 = vsyncpa [#allocation12], 1
    %1907 = vsyncpa [#allocation4], 1
    %s1908 = scalar_lea.sflag [#allocation4], 1
    %1909 = vsyncpa %s1908, 1
    %1910 = vsyncpa [#allocation15], 1
    %s1911 = scalar_lea.sflag [#allocation15], 1
    %1912 = vsyncpa %s1911, 1

</llo_original>
